<compile_context>
chip_gen: v5e
topology: v5e:2x2
jax: 0.10.0
libtpu: 0.0.40
codegen_flags: <defaults>
</compile_context>

<pallas_src>
import math
from functools import partial

import jax
import jax.numpy as jnp
from jax.experimental import pallas as pl
from jax.experimental.pallas import tpu as pltpu


# ----------------------- per-generation tiling config ------------------------

def _vmem_capacity_bytes():
    try:
        return int(pltpu.get_tpu_info().vmem_capacity_bytes)
    except Exception:
        return 0  # unknown -> be conservative


_VMEM_CAP = _vmem_capacity_bytes()
if _VMEM_CAP >= 96 * 1024 * 1024:          # v5e / v6e: 128 MiB physical VMEM
    VMEM_LIMIT = 100 * 1024 * 1024
    TQ_TARGET, TH_TARGET, TV_TARGET = 256, 1024, 4096
else:                                       # v7x (64 MiB) or unknown
    VMEM_LIMIT = 48 * 1024 * 1024
    TQ_TARGET, TH_TARGET, TV_TARGET = 128, 512, 2048


def _pick_tile(dim, target):
    """Largest divisor of `dim` <= target, preferring lane-dense multiples of 128."""
    if dim <= target:
        return dim
    best = 1
    for t in range(128, target + 1, 128):
        if dim % t == 0:
            best = t
    if best > 1:
        return best
    for t in range(target, 0, -1):
        if dim % t == 0:
            return t
    return dim


# ------------------------------ kernel helpers --------------------------------

def _layernorm(x, w, b, eps=1e-5):
    # LayerNorm math kept in f32.
    mu = jnp.mean(x, axis=-1, keepdims=True)
    xc = x - mu
    var = jnp.mean(xc * xc, axis=-1, keepdims=True)
    inv = jax.lax.rsqrt(var + eps)
    return xc * inv * w + b


# --------------------------- 1) LN1 + head-major QKV ---------------------------

def qkv_kernel(x_ref, ln1_w_ref, ln1_b_ref, w_ref, b_ref,
               q_ref, k_ref, v_ref, ln_sc, *, head_dim):
    h = pl.program_id(1)

    # LN1 computed once per batch row (head axis is "arbitrary", so h==0 is
    # guaranteed to run first for each b, also under megacore sharding of B).
    @pl.when(h == 0)
    def _():
        ln_sc[...] = _layernorm(x_ref[0], ln1_w_ref[0],
                                ln1_b_ref[0]).astype(jnp.bfloat16)

    # One head's QKV: (T, E) @ (E, 3*hd) on the MXU, f32 accumulation.
    qkv = jnp.dot(ln_sc[...], w_ref[0],
                  preferred_element_type=jnp.float32) + b_ref[0]     # (T, 3*hd)

    scale = 1.0 / math.sqrt(head_dim)
    q_ref[0, 0] = (qkv[:, :head_dim] * scale).astype(jnp.bfloat16)   # scale folded into q
    k_ref[0, 0] = qkv[:, head_dim:2 * head_dim].astype(jnp.bfloat16)
    v_ref[0, 0] = qkv[:, 2 * head_dim:].astype(jnp.bfloat16)


def run_qkv(x, blk, num_heads):
    B, T, E = x.shape
    hd = E // num_heads
    H = num_heads
    return pl.pallas_call(
        partial(qkv_kernel, head_dim=hd),
        out_shape=(jax.ShapeDtypeStruct((B, H, T, hd), jnp.bfloat16),
                   jax.ShapeDtypeStruct((B, H, T, hd), jnp.bfloat16),
                   jax.ShapeDtypeStruct((B, H, T, hd), jnp.bfloat16)),
        grid=(B, H),
        in_specs=[
            pl.BlockSpec((1, T, E), lambda b, h: (b, 0, 0)),
            pl.BlockSpec((1, E), lambda b, h: (0, 0)),          # ln1_w
            pl.BlockSpec((1, E), lambda b, h: (0, 0)),          # ln1_b
            pl.BlockSpec((1, E, 3 * hd), lambda b, h: (h, 0, 0)),   # head-major W_qkv (bf16)
            pl.BlockSpec((1, 1, 3 * hd), lambda b, h: (h, 0, 0)),   # head-major b_qkv
        ],
        out_specs=(pl.BlockSpec((1, 1, T, hd), lambda b, h: (b, h, 0, 0)),
                   pl.BlockSpec((1, 1, T, hd), lambda b, h: (b, h, 0, 0)),
                   pl.BlockSpec((1, 1, T, hd), lambda b, h: (b, h, 0, 0))),
        scratch_shapes=[pltpu.VMEM((T, E), jnp.bfloat16)],      # hoisted LN1(x) in bf16
        compiler_params=pltpu.CompilerParams(
            dimension_semantics=("parallel", "arbitrary"),
            vmem_limit_bytes=VMEM_LIMIT),
    )(x, blk["ln1_w"], blk["ln1_b"], blk["attn_w_hm"], blk["attn_b_hm"])


# --------------- 2) per-head causal attention + out-proj + residual ------------

def attn_core_kernel(x_ref, q_ref, k_ref, v_ref, pw_ref, pb_ref,
                     o_ref, acc_ref, *, tq):
    h = pl.program_id(2)

    @pl.when(h == 0)
    def _():
        acc_ref[...] = jnp.zeros_like(acc_ref)

    q = q_ref[0, 0]                    # (tq, hd) bf16, pre-scaled by 1/sqrt(hd)
    k = k_ref[0, 0]                    # (T,  hd) bf16
    v = v_ref[0, 0]                    # (T,  hd) bf16
    T = k.shape[0]

    # Scores for one head / one q tile only: (tq, T) f32.
    s = jax.lax.dot_general(q, k, (((1,), (1,)), ((), ())),
                            preferred_element_type=jnp.float32)

    # Per-q-tile causal mask (tq, T) instead of a full (T, T) plane.
    qi = pl.program_id(1)
    row = qi * tq + jax.lax.broadcasted_iota(jnp.int32, (tq, T), 0)
    col = jax.lax.broadcasted_iota(jnp.int32, (tq, T), 1)
    s = jnp.where(row >= col, s, -1e30)          # large finite negative (mask-safe)

    s = s - jnp.max(s, axis=-1, keepdims=True)
    p = jnp.exp(s)
    p = p * pl.reciprocal(jnp.sum(p, axis=-1, keepdims=True), approx=True)

    y = jnp.dot(p.astype(jnp.bfloat16), v,
                preferred_element_type=jnp.float32)              # (tq, hd)

    # Fold this head's output through its slice of the output projection.
    acc_ref[...] += jnp.dot(y.astype(jnp.bfloat16), pw_ref[0],
                            preferred_element_type=jnp.float32)  # (tq, E)

    @pl.when(h == pl.num_programs(2) - 1)
    def _():
        o_ref[0] = x_ref[0] + acc_ref[...] + pb_ref[0]           # residual add


def run_attn_core(x, q, k, v, blk, tq):
    B, T, E = x.shape
    H, hd = q.shape[1], q.shape[3]
    nq = T // tq
    return pl.pallas_call(
        partial(attn_core_kernel, tq=tq),
        out_shape=jax.ShapeDtypeStruct((B, T, E), jnp.float32),
        grid=(B, nq, H),                           # head (reduction) axis last
        in_specs=[
            pl.BlockSpec((1, tq, E), lambda b, i, h: (b, i, 0)),      # x (residual)
            pl.BlockSpec((1, 1, tq, hd), lambda b, i, h: (b, h, i, 0)),  # q
            pl.BlockSpec((1, 1, T, hd), lambda b, i, h: (b, h, 0, 0)),   # k
            pl.BlockSpec((1, 1, T, hd), lambda b, i, h: (b, h, 0, 0)),   # v
            pl.BlockSpec((1, hd, E), lambda b, i, h: (h, 0, 0)),      # W_proj head slice (bf16)
            pl.BlockSpec((1, E), lambda b, i, h: (0, 0)),             # proj_b
        ],
        out_specs=pl.BlockSpec((1, tq, E), lambda b, i, h: (b, i, 0)),
        scratch_shapes=[pltpu.VMEM((tq, E), jnp.float32)],
        compiler_params=pltpu.CompilerParams(
            dimension_semantics=("parallel", "parallel", "arbitrary"),
            vmem_limit_bytes=VMEM_LIMIT),
    )(x, q, k, v, blk["proj_w_hm"], blk["proj_b"])


# ------------------------------ 3) MLP sub-block --------------------------------

def mlp_kernel(x_ref, ln2_w_ref, ln2_b_ref, fc_w_ref, fc_b_ref,
               pw_ref, pb_ref, o_ref, h2_ref, acc_ref):
    j = pl.program_id(1)

    # LN2 (and the bf16 cast) hoisted out of the hidden-dim reduction loop.
    @pl.when(j == 0)
    def _():
        h2_ref[...] = _layernorm(x_ref[0], ln2_w_ref[0],
                                 ln2_b_ref[0]).astype(jnp.bfloat16)
        acc_ref[...] = jnp.zeros_like(acc_ref)

    hid = jnp.dot(h2_ref[...], fc_w_ref[...],
                  preferred_element_type=jnp.float32) + fc_b_ref[0]   # (T, th)
    hid = jax.nn.gelu(hid, approximate=True)   # TODO(synk): FeedforwardModule not shown; assumes tanh-GELU
    acc_ref[...] += jnp.dot(hid.astype(jnp.bfloat16), pw_ref[...],
                            preferred_element_type=jnp.float32)

    @pl.when(j == pl.num_programs(1) - 1)
    def _():
        o_ref[0] = x_ref[0] + acc_ref[...] + pb_ref[0]


def run_mlp(x, blk):
    B, T, E = x.shape
    H4 = blk["fc_w"].shape[1]                    # 4*E
    th = _pick_tile(H4, TH_TARGET)               # hidden-dim tile (streamed weights)
    nj = H4 // th
    return pl.pallas_call(
        mlp_kernel,
        out_shape=jax.ShapeDtypeStruct((B, T, E), jnp.float32),
        grid=(B, nj),                             # reduction axis (hidden) last
        in_specs=[
            pl.BlockSpec((1, T, E), lambda b, j: (b, 0, 0)),
            pl.BlockSpec((1, E), lambda b, j: (0, 0)),       # ln2_w
            pl.BlockSpec((1, E), lambda b, j: (0, 0)),       # ln2_b
            pl.BlockSpec((E, th), lambda b, j: (0, j)),      # fc_w tile (bf16)
            pl.BlockSpec((1, th), lambda b, j: (0, j)),      # fc_b tile
            pl.BlockSpec((th, E), lambda b, j: (j, 0)),      # fcproj_w tile (bf16)
            pl.BlockSpec((1, E), lambda b, j: (0, 0)),       # fcproj_b
        ],
        out_specs=pl.BlockSpec((1, T, E), lambda b, j: (b, 0, 0)),
        scratch_shapes=[pltpu.VMEM((T, E), jnp.bfloat16),    # hoisted LN2(x)
                        pltpu.VMEM((T, E), jnp.float32)],    # accumulator
        compiler_params=pltpu.CompilerParams(
            dimension_semantics=("parallel", "arbitrary"),
            vmem_limit_bytes=VMEM_LIMIT),
    )(x, blk["ln2_w"], blk["ln2_b"], blk["fc_w"], blk["fc_b"],
      blk["fcproj_w"], blk["fcproj_b"])


# ------------------------- 4) lm_head (tied weights) -----------------------------

def head_kernel(xln_ref, wte_t_ref, o_ref):
    # Pure matmul per vocab tile; ln_f was hoisted to the wrapper (computed once).
    o_ref[...] = jnp.dot(xln_ref[...], wte_t_ref[...],
                         preferred_element_type=jnp.float32)


def run_head(x_ln_bf16, wte_t):
    B, E = x_ln_bf16.shape
    V = wte_t.shape[1]
    tv = _pick_tile(V, TV_TARGET)      # vocab tile (pad V to a mult. of 128 for real configs)
    nv = V // tv
    return pl.pallas_call(
        head_kernel,
        out_shape=jax.ShapeDtypeStruct((B, V), jnp.float32),
        grid=(nv,),
        in_specs=[
            pl.BlockSpec((B, E), lambda i: (0, 0)),
            pl.BlockSpec((E, tv), lambda i: (0, i)),          # wte_t tile (bf16)
        ],
        out_specs=pl.BlockSpec((B, tv), lambda i: (0, i)),
        compiler_params=pltpu.CompilerParams(
            dimension_semantics=("parallel",),
            vmem_limit_bytes=VMEM_LIMIT),
    )(x_ln_bf16, wte_t)


# ------------------------------ parameters ---------------------------------------

def _qkv_head_major(w, b, num_heads):
    # w: (E, 3E) [in, out], out columns = [q | k | v], each head-minor (H, hd).
    # -> (H, E, 3*hd) so each grid step consumes exactly one head's weights with
    #    no in-kernel reshape/transpose.  Pure wrapper-side layout plumbing.
    E = w.shape[0]
    hd = E // num_heads
    w_hm = jnp.transpose(w.reshape(E, 3, num_heads, hd),
                         (2, 0, 1, 3)).reshape(num_heads, E, 3 * hd)
    b_hm = jnp.transpose(b.reshape(3, num_heads, hd),
                         (1, 0, 2)).reshape(num_heads, 1, 3 * hd)
    return w_hm, b_hm


def init_params(key, vocab_size, embed_size, context_len, num_blocks, num_heads):
    E = embed_size
    hd = E // num_heads
    std = 0.02
    proj_std = 0.02 / math.sqrt(2 * num_blocks)

    keys = jax.random.split(key, 2 + 4 * num_blocks)
    wte = std * jax.random.normal(keys[0], (vocab_size, E), jnp.float32)
    wpe = std * jax.random.normal(keys[1], (context_len, E), jnp.float32)

    blocks = []
    for i in range(num_blocks):
        k1, k2, k3, k4 = keys[2 + 4 * i: 6 + 4 * i]
        attn_w = std * jax.random.normal(k1, (E, 3 * E), jnp.float32)
        attn_b = jnp.zeros((3 * E,), jnp.float32)
        attn_w_hm, attn_b_hm = _qkv_head_major(attn_w, attn_b, num_heads)
        proj_w = proj_std * jax.random.normal(k2, (E, E), jnp.float32)
        blocks.append(dict(
            ln1_w=jnp.ones((1, E), jnp.float32),
            ln1_b=jnp.zeros((1, E), jnp.float32),
            attn_w_hm=attn_w_hm.astype(jnp.bfloat16),            # (H, E, 3*hd)
            attn_b_hm=attn_b_hm,                                  # (H, 1, 3*hd) f32
            proj_w_hm=proj_w.reshape(num_heads, hd, E).astype(jnp.bfloat16),  # (H, hd, E)
            proj_b=jnp.zeros((1, E), jnp.float32),
            ln2_w=jnp.ones((1, E), jnp.float32),
            ln2_b=jnp.zeros((1, E), jnp.float32),
            fc_w=(std * jax.random.normal(k3, (E, 4 * E), jnp.float32)
                  ).astype(jnp.bfloat16),
            fc_b=jnp.zeros((1, 4 * E), jnp.float32),
            fcproj_w=(proj_std * jax.random.normal(k4, (4 * E, E), jnp.float32)
                      ).astype(jnp.bfloat16),
            fcproj_b=jnp.zeros((1, E), jnp.float32),
        ))

    return dict(
        wte=wte,                                  # f32, for embedding gather
        wte_t=wte.T.astype(jnp.bfloat16),         # (E, V) bf16, tied lm_head weight
        wpe=wpe,
        blocks=blocks,
        lnf_w=jnp.ones((1, E), jnp.float32),
        lnf_b=jnp.zeros((1, E), jnp.float32),
    )


# ------------------------------ GPT forward --------------------------------------

def gpt_forward(params, token_idxs, num_heads):
    # targets=None path of GPT.forward: returns logits for the last position only.
    B, T = token_idxs.shape
    tok_emb = jnp.take(params["wte"], token_idxs, axis=0)        # (B, T, E) glue gather
    pos_emb = params["wpe"][:T]                                  # (T, E)
    x = tok_emb + pos_emb                                        # dropout -> identity (inference)

    tq = _pick_tile(T, TQ_TARGET)                                # q-tile for attention
    for blk in params["blocks"]:
        q, k, v = run_qkv(x, blk, num_heads)                     # LN1 + head-major QKV
        x = run_attn_core(x, q, k, v, blk, tq)                   # attn + proj + residual
        x = run_mlp(x, blk)                                      # LN2 + MLP + residual

    # ln_f hoisted out of the vocab-tile loop: computed once on the last token.
    x_last = x[:, -1, :]                                         # (B, E)
    x_ln = _layernorm(x_last, params["lnf_w"], params["lnf_b"]).astype(jnp.bfloat16)
    logits = run_head(x_ln, params["wte_t"])
    return logits[:, None, :]                                    # (B, 1, vocab)


# --------------------------------- main -------------------------------------------

if __name__ == "__main__":
    vocab_size = 64
    embed_size = 32
    context_len = 16
    num_blocks = 2
    num_heads = 4
    batch, seq_len = 2, 8

    key = jax.random.PRNGKey(0)
    pkey, ikey = jax.random.split(key)
    params = init_params(pkey, vocab_size, embed_size, context_len,
                         num_blocks, num_heads)
    token_idxs = jax.random.randint(ikey, (batch, seq_len), 0, vocab_size, jnp.int32)

    fwd = jax.jit(partial(gpt_forward, num_heads=num_heads))
    logits = fwd(params, token_idxs)
    logits = jax.block_until_ready(logits)
    assert logits.shape == (batch, 1, vocab_size)
    assert bool(jnp.all(jnp.isfinite(logits)))
    print("KERNEL_OK")
</pallas_src>

<mosaic_0001>
module attributes {stable_mosaic.version = 11 : i64} {
  func.func @qkv_kernel(%arg0: i32, %arg1: i32, %arg2: memref<1x8x32xf32, #tpu.memory_space<vmem>>, %arg3: memref<1x32xf32, #tpu.memory_space<vmem>>, %arg4: memref<1x32xf32, #tpu.memory_space<vmem>>, %arg5: memref<1x32x24xbf16, #tpu.memory_space<vmem>>, %arg6: memref<1x1x24xf32, #tpu.memory_space<vmem>>, %arg7: memref<1x1x8x8xbf16, #tpu.memory_space<vmem>>, %arg8: memref<1x1x8x8xbf16, #tpu.memory_space<vmem>>, %arg9: memref<1x1x8x8xbf16, #tpu.memory_space<vmem>>, %arg10: memref<8x32xbf16, #tpu.memory_space<vmem>>) attributes {dimension_semantics = [#tpu.dimension_semantics<parallel>, #tpu.dimension_semantics<arbitrary>], iteration_bounds = array<i64: 2, 4>, scalar_prefetch = 0 : i64, scratch_operands = 1 : i64, tpu.core_type = #tpu.core_type<tc>, window_params = [{transform_indices = @transform_0, window_bounds = array<i64: 1, 8, 32>}, {pipeline_mode = #tpu.pipeline_mode<synchronous>, transform_indices = @transform_1, window_bounds = array<i64: 1, 32>}, {pipeline_mode = #tpu.pipeline_mode<synchronous>, transform_indices = @transform_2, window_bounds = array<i64: 1, 32>}, {transform_indices = @transform_3, window_bounds = array<i64: 1, 32, 24>}, {transform_indices = @transform_4, window_bounds = array<i64: 1, 1, 24>}, {transform_indices = @transform_5, window_bounds = array<i64: 1, 1, 8, 8>}, {transform_indices = @transform_6, window_bounds = array<i64: 1, 1, 8, 8>}, {transform_indices = @transform_7, window_bounds = array<i64: 1, 1, 8, 8>}]} {
    %c0_i32 = arith.constant 0 : i32
    %0 = arith.cmpi eq, %arg1, %c0_i32 : i32
    %1 = arith.extui %0 : i1 to i32
    %c0_i32_0 = arith.constant 0 : i32
    %2 = arith.cmpi ne, %1, %c0_i32_0 : i32
    scf.if %2 {
      %c0_21 = arith.constant 0 : index
      %c0_22 = arith.constant 0 : index
      %c0_23 = arith.constant 0 : index
      %28 = vector.load %arg2[%c0_21, %c0_22, %c0_23] : memref<1x8x32xf32, #tpu.memory_space<vmem>>, vector<1x8x32xf32>
      %29 = vector.shape_cast %28 : vector<1x8x32xf32> to vector<8x32xf32>
      %c0_24 = arith.constant 0 : index
      %c0_25 = arith.constant 0 : index
      %30 = vector.load %arg3[%c0_24, %c0_25] : memref<1x32xf32, #tpu.memory_space<vmem>>, vector<1x32xf32>
      %31 = vector.shape_cast %30 : vector<1x32xf32> to vector<32xf32>
      %c0_26 = arith.constant 0 : index
      %c0_27 = arith.constant 0 : index
      %32 = vector.load %arg4[%c0_26, %c0_27] : memref<1x32xf32, #tpu.memory_space<vmem>>, vector<1x32xf32>
      %33 = vector.shape_cast %32 : vector<1x32xf32> to vector<32xf32>
      %cst_28 = arith.constant dense<0.000000e+00> : vector<8xf32>
      %34 = vector.multi_reduction <add>, %29, %cst_28 [1] : vector<8x32xf32> to vector<8xf32>
      %35 = vector.shape_cast %34 : vector<8xf32> to vector<8x1xf32>
      %cst_29 = arith.constant 3.200000e+01 : f32
      %36 = vector.broadcast %cst_29 : f32 to vector<8x1xf32>
      %37 = arith.divf %35, %36 : vector<8x1xf32>
      %38 = vector.broadcast %37 : vector<8x1xf32> to vector<8x32xf32>
      %39 = arith.subf %29, %38 : vector<8x32xf32>
      %40 = arith.mulf %39, %39 : vector<8x32xf32>
      %cst_30 = arith.constant dense<0.000000e+00> : vector<8xf32>
      %41 = vector.multi_reduction <add>, %40, %cst_30 [1] : vector<8x32xf32> to vector<8xf32>
      %42 = vector.shape_cast %41 : vector<8xf32> to vector<8x1xf32>
      %cst_31 = arith.constant 3.200000e+01 : f32
      %43 = vector.broadcast %cst_31 : f32 to vector<8x1xf32>
      %44 = arith.divf %42, %43 : vector<8x1xf32>
      %cst_32 = arith.constant 9.99999974E-6 : f32
      %45 = vector.broadcast %cst_32 : f32 to vector<8x1xf32>
      %46 = arith.addf %44, %45 : vector<8x1xf32>
      %47 = math.rsqrt %46 : vector<8x1xf32>
      %48 = vector.broadcast %47 : vector<8x1xf32> to vector<8x32xf32>
      %49 = arith.mulf %39, %48 : vector<8x32xf32>
      %50 = vector.shape_cast %31 : vector<32xf32> to vector<1x32xf32>
      %51 = vector.broadcast %50 : vector<1x32xf32> to vector<8x32xf32>
      %52 = arith.mulf %49, %51 : vector<8x32xf32>
      %53 = vector.shape_cast %33 : vector<32xf32> to vector<1x32xf32>
      %54 = vector.broadcast %53 : vector<1x32xf32> to vector<8x32xf32>
      %55 = arith.addf %52, %54 : vector<8x32xf32>
      %56 = arith.truncf %55 : vector<8x32xf32> to vector<8x32xbf16>
      %c0_33 = arith.constant 0 : index
      %c0_34 = arith.constant 0 : index
      %57 = vector.load %arg10[%c0_33, %c0_34] : memref<8x32xbf16, #tpu.memory_space<vmem>>, vector<8x32xbf16>
      tpu.vector_store %arg10[%c0_33, %c0_34], %56 {strides = array<i32>} : memref<8x32xbf16, #tpu.memory_space<vmem>>, vector<8x32xbf16>,
    } else {
    }
    %c0 = arith.constant 0 : index
    %c0_1 = arith.constant 0 : index
    %3 = vector.load %arg10[%c0, %c0_1] : memref<8x32xbf16, #tpu.memory_space<vmem>>, vector<8x32xbf16>
    %c0_2 = arith.constant 0 : index
    %c0_3 = arith.constant 0 : index
    %c0_4 = arith.constant 0 : index
    %4 = vector.load %arg5[%c0_2, %c0_3, %c0_4] : memref<1x32x24xbf16, #tpu.memory_space<vmem>>, vector<1x32x24xbf16>
    %5 = vector.shape_cast %4 : vector<1x32x24xbf16> to vector<32x24xbf16>
    %cst = arith.constant dense<0.000000e+00> : vector<8x24xf32>
    %6 = tpu.matmul %3, %5, %cst {dimension_numbers = #tpu.dot_dimension_numbers<[1], [0], [0], [1], [0, 0, 1, 1], [], []>} : vector<8x32xbf16>, vector<32x24xbf16>, vector<8x24xf32> -> vector<8x24xf32>
    %c0_5 = arith.constant 0 : index
    %c0_6 = arith.constant 0 : index
    %c0_7 = arith.constant 0 : index
    %7 = vector.load %arg6[%c0_5, %c0_6, %c0_7] : memref<1x1x24xf32, #tpu.memory_space<vmem>>, vector<1x1x24xf32>
    %8 = vector.shape_cast %7 : vector<1x1x24xf32> to vector<1x24xf32>
    %9 = vector.broadcast %8 : vector<1x24xf32> to vector<8x24xf32>
    %10 = arith.addf %6, %9 : vector<8x24xf32>
    %11 = vector.extract_strided_slice %10 {offsets = [0, 0], sizes = [8, 8], strides = [1, 1]} : vector<8x24xf32> to vector<8x8xf32>
    %cst_8 = arith.constant 0.353553385 : f32
    %12 = vector.broadcast %cst_8 : f32 to vector<8x8xf32>
    %13 = arith.mulf %11, %12 : vector<8x8xf32>
    %14 = arith.truncf %13 : vector<8x8xf32> to vector<8x8xbf16>
    %c0_9 = arith.constant 0 : index
    %c0_10 = arith.constant 0 : index
    %c0_11 = arith.constant 0 : index
    %c0_12 = arith.constant 0 : index
    %15 = vector.load %arg7[%c0_9, %c0_10, %c0_11, %c0_12] : memref<1x1x8x8xbf16, #tpu.memory_space<vmem>>, vector<1x1x8x8xbf16>
    %16 = vector.shape_cast %15 : vector<1x1x8x8xbf16> to vector<8x8xbf16>
    %17 = vector.shape_cast %14 : vector<8x8xbf16> to vector<1x1x8x8xbf16>
    tpu.vector_store %arg7[%c0_9, %c0_10, %c0_11, %c0_12], %17 {strides = array<i32>} : memref<1x1x8x8xbf16, #tpu.memory_space<vmem>>, vector<1x1x8x8xbf16>,
    %18 = vector.extract_strided_slice %10 {offsets = [0, 8], sizes = [8, 8], strides = [1, 1]} : vector<8x24xf32> to vector<8x8xf32>
    %19 = arith.truncf %18 : vector<8x8xf32> to vector<8x8xbf16>
    %c0_13 = arith.constant 0 : index
    %c0_14 = arith.constant 0 : index
    %c0_15 = arith.constant 0 : index
    %c0_16 = arith.constant 0 : index
    %20 = vector.load %arg8[%c0_13, %c0_14, %c0_15, %c0_16] : memref<1x1x8x8xbf16, #tpu.memory_space<vmem>>, vector<1x1x8x8xbf16>
    %21 = vector.shape_cast %20 : vector<1x1x8x8xbf16> to vector<8x8xbf16>
    %22 = vector.shape_cast %19 : vector<8x8xbf16> to vector<1x1x8x8xbf16>
    tpu.vector_store %arg8[%c0_13, %c0_14, %c0_15, %c0_16], %22 {strides = array<i32>} : memref<1x1x8x8xbf16, #tpu.memory_space<vmem>>, vector<1x1x8x8xbf16>,
    %23 = vector.extract_strided_slice %10 {offsets = [0, 16], sizes = [8, 8], strides = [1, 1]} : vector<8x24xf32> to vector<8x8xf32>
    %24 = arith.truncf %23 : vector<8x8xf32> to vector<8x8xbf16>
    %c0_17 = arith.constant 0 : index
    %c0_18 = arith.constant 0 : index
    %c0_19 = arith.constant 0 : index
    %c0_20 = arith.constant 0 : index
    %25 = vector.load %arg9[%c0_17, %c0_18, %c0_19, %c0_20] : memref<1x1x8x8xbf16, #tpu.memory_space<vmem>>, vector<1x1x8x8xbf16>
    %26 = vector.shape_cast %25 : vector<1x1x8x8xbf16> to vector<8x8xbf16>
    %27 = vector.shape_cast %24 : vector<8x8xbf16> to vector<1x1x8x8xbf16>
    tpu.vector_store %arg9[%c0_17, %c0_18, %c0_19, %c0_20], %27 {strides = array<i32>} : memref<1x1x8x8xbf16, #tpu.memory_space<vmem>>, vector<1x1x8x8xbf16>,
    return
  }
  func.func @transform_0(%arg0: i32, %arg1: i32) -> (i32, i32, i32) {
    %c0_i32 = arith.constant 0 : i32
    %c0_i32_0 = arith.constant 0 : i32
    %c0_i32_1 = arith.constant 0 : i32
    return %arg0, %c0_i32, %c0_i32_0 : i32, i32, i32
  }
  func.func @transform_1(%arg0: i32, %arg1: i32) -> (i32, i32) {
    %c0_i32 = arith.constant 0 : i32
    %c0_i32_0 = arith.constant 0 : i32
    %c0_i32_1 = arith.constant 0 : i32
    return %c0_i32, %c0_i32_0 : i32, i32
  }
  func.func @transform_2(%arg0: i32, %arg1: i32) -> (i32, i32) {
    %c0_i32 = arith.constant 0 : i32
    %c0_i32_0 = arith.constant 0 : i32
    %c0_i32_1 = arith.constant 0 : i32
    return %c0_i32, %c0_i32_0 : i32, i32
  }
  func.func @transform_3(%arg0: i32, %arg1: i32) -> (i32, i32, i32) {
    %c0_i32 = arith.constant 0 : i32
    %c0_i32_0 = arith.constant 0 : i32
    %c0_i32_1 = arith.constant 0 : i32
    return %arg1, %c0_i32, %c0_i32_0 : i32, i32, i32
  }
  func.func @transform_4(%arg0: i32, %arg1: i32) -> (i32, i32, i32) {
    %c0_i32 = arith.constant 0 : i32
    %c0_i32_0 = arith.constant 0 : i32
    %c0_i32_1 = arith.constant 0 : i32
    return %arg1, %c0_i32, %c0_i32_0 : i32, i32, i32
  }
  func.func @transform_5(%arg0: i32, %arg1: i32) -> (i32, i32, i32, i32) {
    %c0_i32 = arith.constant 0 : i32
    %c0_i32_0 = arith.constant 0 : i32
    %c0_i32_1 = arith.constant 0 : i32
    return %arg0, %arg1, %c0_i32, %c0_i32_0 : i32, i32, i32, i32
  }
  func.func @transform_6(%arg0: i32, %arg1: i32) -> (i32, i32, i32, i32) {
    %c0_i32 = arith.constant 0 : i32
    %c0_i32_0 = arith.constant 0 : i32
    %c0_i32_1 = arith.constant 0 : i32
    return %arg0, %arg1, %c0_i32, %c0_i32_0 : i32, i32, i32, i32
  }
  func.func @transform_7(%arg0: i32, %arg1: i32) -> (i32, i32, i32, i32) {
    %c0_i32 = arith.constant 0 : i32
    %c0_i32_0 = arith.constant 0 : i32
    %c0_i32_1 = arith.constant 0 : i32
    return %arg0, %arg1, %c0_i32, %c0_i32_0 : i32, i32, i32, i32
  }
}

module attributes {stable_mosaic.version = 11 : i64} {
  func.func @attn_core_kernel(%arg0: i32, %arg1: i32, %arg2: i32, %arg3: memref<1x8x32xf32, #tpu.memory_space<vmem>>, %arg4: memref<1x1x8x8xbf16, #tpu.memory_space<vmem>>, %arg5: memref<1x1x8x8xbf16, #tpu.memory_space<vmem>>, %arg6: memref<1x1x8x8xbf16, #tpu.memory_space<vmem>>, %arg7: memref<1x8x32xbf16, #tpu.memory_space<vmem>>, %arg8: memref<1x32xf32, #tpu.memory_space<vmem>>, %arg9: memref<1x8x32xf32, #tpu.memory_space<vmem>>, %arg10: memref<8x32xf32, #tpu.memory_space<vmem>>) attributes {dimension_semantics = [#tpu.dimension_semantics<parallel>, #tpu.dimension_semantics<parallel>, #tpu.dimension_semantics<arbitrary>], iteration_bounds = array<i64: 2, 1, 4>, scalar_prefetch = 0 : i64, scratch_operands = 1 : i64, tpu.core_type = #tpu.core_type<tc>, window_params = [{transform_indices = @transform_0, window_bounds = array<i64: 1, 8, 32>}, {transform_indices = @transform_1, window_bounds = array<i64: 1, 1, 8, 8>}, {transform_indices = @transform_2, window_bounds = array<i64: 1, 1, 8, 8>}, {transform_indices = @transform_3, window_bounds = array<i64: 1, 1, 8, 8>}, {transform_indices = @transform_4, window_bounds = array<i64: 1, 8, 32>}, {pipeline_mode = #tpu.pipeline_mode<synchronous>, transform_indices = @transform_5, window_bounds = array<i64: 1, 32>}, {transform_indices = @transform_6, window_bounds = array<i64: 1, 8, 32>}]} {
    %c0_i32 = arith.constant 0 : i32
    %0 = arith.cmpi eq, %arg2, %c0_i32 : i32
    %1 = arith.extui %0 : i1 to i32
    %c0_i32_0 = arith.constant 0 : i32
    %2 = arith.cmpi ne, %1, %c0_i32_0 : i32
    scf.if %2 {
      %cst_25 = arith.constant 0.000000e+00 : f32
      %40 = vector.broadcast %cst_25 : f32 to vector<8x32xf32>
      %c0_26 = arith.constant 0 : index
      %c0_27 = arith.constant 0 : index
      %41 = vector.load %arg10[%c0_26, %c0_27] : memref<8x32xf32, #tpu.memory_space<vmem>>, vector<8x32xf32>
      tpu.vector_store %arg10[%c0_26, %c0_27], %40 {strides = array<i32>} : memref<8x32xf32, #tpu.memory_space<vmem>>, vector<8x32xf32>,
    } else {
    }
    %c0 = arith.constant 0 : index
    %c0_1 = arith.constant 0 : index
    %c0_2 = arith.constant 0 : index
    %c0_3 = arith.constant 0 : index
    %3 = vector.load %arg4[%c0, %c0_1, %c0_2, %c0_3] : memref<1x1x8x8xbf16, #tpu.memory_space<vmem>>, vector<1x1x8x8xbf16>
    %4 = vector.shape_cast %3 : vector<1x1x8x8xbf16> to vector<8x8xbf16>
    %c0_4 = arith.constant 0 : index
    %c0_5 = arith.constant 0 : index
    %c0_6 = arith.constant 0 : index
    %c0_7 = arith.constant 0 : index
    %5 = vector.load %arg5[%c0_4, %c0_5, %c0_6, %c0_7] : memref<1x1x8x8xbf16, #tpu.memory_space<vmem>>, vector<1x1x8x8xbf16>
    %6 = vector.shape_cast %5 : vector<1x1x8x8xbf16> to vector<8x8xbf16>
    %c0_8 = arith.constant 0 : index
    %c0_9 = arith.constant 0 : index
    %c0_10 = arith.constant 0 : index
    %c0_11 = arith.constant 0 : index
    %7 = vector.load %arg6[%c0_8, %c0_9, %c0_10, %c0_11] : memref<1x1x8x8xbf16, #tpu.memory_space<vmem>>, vector<1x1x8x8xbf16>
    %8 = vector.shape_cast %7 : vector<1x1x8x8xbf16> to vector<8x8xbf16>
    %cst = arith.constant dense<0.000000e+00> : vector<8x8xf32>
    %9 = tpu.matmul %4, %6, %cst {dimension_numbers = #tpu.dot_dimension_numbers<[1], [1], [0], [0], [0, 0, 1, 0], [], []>} : vector<8x8xbf16>, vector<8x8xbf16>, vector<8x8xf32> -> vector<8x8xf32>
    %c8_i32 = arith.constant 8 : i32
    %10 = arith.muli %arg1, %c8_i32 : i32
    %11 = tpu.iota {dimensions = array<i32: 0>} : vector<8x8xi32>
    %12 = vector.broadcast %10 : i32 to vector<8x8xi32>
    %13 = arith.addi %12, %11 : vector<8x8xi32>
    %14 = tpu.iota {dimensions = array<i32: 1>} : vector<8x8xi32>
    %15 = arith.cmpi sge, %13, %14 : vector<8x8xi32>
    %cst_12 = arith.constant -1.000000e+30 : f32
    %16 = vector.broadcast %cst_12 : f32 to vector<8x8xf32>
    %17 = arith.select %15, %9, %16 : vector<8x8xi1>, vector<8x8xf32>
    %cst_13 = arith.constant dense<0xFF800000> : vector<8xf32>
    %18 = vector.multi_reduction <maximumf>, %17, %cst_13 [1] : vector<8x8xf32> to vector<8xf32>
    %19 = vector.shape_cast %18 : vector<8xf32> to vector<8x1xf32>
    %20 = vector.broadcast %19 : vector<8x1xf32> to vector<8x8xf32>
    %21 = arith.subf %17, %20 : vector<8x8xf32>
    %22 = math.exp %21 : vector<8x8xf32>
    %cst_14 = arith.constant dense<0.000000e+00> : vector<8xf32>
    %23 = vector.multi_reduction <add>, %22, %cst_14 [1] : vector<8x8xf32> to vector<8xf32>
    %24 = vector.shape_cast %23 : vector<8xf32> to vector<8x1xf32>
    %25 = tpu.reciprocal %24 {approx = true} : vector<8x1xf32> -> vector<8x1xf32>
    %26 = vector.broadcast %25 : vector<8x1xf32> to vector<8x8xf32>
    %27 = arith.mulf %22, %26 : vector<8x8xf32>
    %28 = arith.truncf %27 : vector<8x8xf32> to vector<8x8xbf16>
    %cst_15 = arith.constant dense<0.000000e+00> : vector<8x8xf32>
    %29 = tpu.matmul %28, %8, %cst_15 {dimension_numbers = #tpu.dot_dimension_numbers<[1], [0], [0], [1], [0, 0, 1, 1], [], []>} : vector<8x8xbf16>, vector<8x8xbf16>, vector<8x8xf32> -> vector<8x8xf32>
    %c0_16 = arith.constant 0 : index
    %c0_17 = arith.constant 0 : index
    %30 = vector.load %arg10[%c0_16, %c0_17] : memref<8x32xf32, #tpu.memory_space<vmem>>, vector<8x32xf32>
    %31 = arith.truncf %29 : vector<8x8xf32> to vector<8x8xbf16>
    %c0_18 = arith.constant 0 : index
    %c0_19 = arith.constant 0 : index
    %c0_20 = arith.constant 0 : index
    %32 = vector.load %arg7[%c0_18, %c0_19, %c0_20] : memref<1x8x32xbf16, #tpu.memory_space<vmem>>, vector<1x8x32xbf16>
    %33 = vector.shape_cast %32 : vector<1x8x32xbf16> to vector<8x32xbf16>
    %cst_21 = arith.constant dense<0.000000e+00> : vector<8x32xf32>
    %34 = tpu.matmul %31, %33, %cst_21 {dimension_numbers = #tpu.dot_dimension_numbers<[1], [0], [0], [1], [0, 0, 1, 1], [], []>} : vector<8x8xbf16>, vector<8x32xbf16>, vector<8x32xf32> -> vector<8x32xf32>
    %35 = arith.addf %30, %34 : vector<8x32xf32>
    %c0_22 = arith.constant 0 : index
    %c0_23 = arith.constant 0 : index
    %36 = vector.load %arg10[%c0_22, %c0_23] : memref<8x32xf32, #tpu.memory_space<vmem>>, vector<8x32xf32>
    tpu.vector_store %arg10[%c0_22, %c0_23], %35 {strides = array<i32>} : memref<8x32xf32, #tpu.memory_space<vmem>>, vector<8x32xf32>,
    %c3_i32 = arith.constant 3 : i32
    %37 = arith.cmpi eq, %arg2, %c3_i32 : i32
    %38 = arith.extui %37 : i1 to i32
    %c0_i32_24 = arith.constant 0 : i32
    %39 = arith.cmpi ne, %38, %c0_i32_24 : i32
    scf.if %39 {
      %c0_25 = arith.constant 0 : index
      %c0_26 = arith.constant 0 : index
      %c0_27 = arith.constant 0 : index
      %40 = vector.load %arg3[%c0_25, %c0_26, %c0_27] : memref<1x8x32xf32, #tpu.memory_space<vmem>>, vector<1x8x32xf32>
      %41 = vector.shape_cast %40 : vector<1x8x32xf32> to vector<8x32xf32>
      %c0_28 = arith.constant 0 : index
      %c0_29 = arith.constant 0 : index
      %42 = vector.load %arg10[%c0_28, %c0_29] : memref<8x32xf32, #tpu.memory_space<vmem>>, vector<8x32xf32>
      %43 = arith.addf %41, %42 : vector<8x32xf32>
      %c0_30 = arith.constant 0 : index
      %c0_31 = arith.constant 0 : index
      %44 = vector.load %arg8[%c0_30, %c0_31] : memref<1x32xf32, #tpu.memory_space<vmem>>, vector<1x32xf32>
      %45 = vector.shape_cast %44 : vector<1x32xf32> to vector<32xf32>
      %46 = vector.shape_cast %45 : vector<32xf32> to vector<1x32xf32>
      %47 = vector.broadcast %46 : vector<1x32xf32> to vector<8x32xf32>
      %48 = arith.addf %43, %47 : vector<8x32xf32>
      %c0_32 = arith.constant 0 : index
      %c0_33 = arith.constant 0 : index
      %c0_34 = arith.constant 0 : index
      %49 = vector.load %arg9[%c0_32, %c0_33, %c0_34] : memref<1x8x32xf32, #tpu.memory_space<vmem>>, vector<1x8x32xf32>
      %50 = vector.shape_cast %49 : vector<1x8x32xf32> to vector<8x32xf32>
      %51 = vector.shape_cast %48 : vector<8x32xf32> to vector<1x8x32xf32>
      tpu.vector_store %arg9[%c0_32, %c0_33, %c0_34], %51 {strides = array<i32>} : memref<1x8x32xf32, #tpu.memory_space<vmem>>, vector<1x8x32xf32>,
    } else {
    }
    return
  }
  func.func @transform_0(%arg0: i32, %arg1: i32, %arg2: i32) -> (i32, i32, i32) {
    %c0_i32 = arith.constant 0 : i32
    %c0_i32_0 = arith.constant 0 : i32
    return %arg0, %arg1, %c0_i32 : i32, i32, i32
  }
  func.func @transform_1(%arg0: i32, %arg1: i32, %arg2: i32) -> (i32, i32, i32, i32) {
    %c0_i32 = arith.constant 0 : i32
    %c0_i32_0 = arith.constant 0 : i32
    return %arg0, %arg2, %arg1, %c0_i32 : i32, i32, i32, i32
  }
  func.func @transform_2(%arg0: i32, %arg1: i32, %arg2: i32) -> (i32, i32, i32, i32) {
    %c0_i32 = arith.constant 0 : i32
    %c0_i32_0 = arith.constant 0 : i32
    %c0_i32_1 = arith.constant 0 : i32
    return %arg0, %arg2, %c0_i32, %c0_i32_0 : i32, i32, i32, i32
  }
  func.func @transform_3(%arg0: i32, %arg1: i32, %arg2: i32) -> (i32, i32, i32, i32) {
    %c0_i32 = arith.constant 0 : i32
    %c0_i32_0 = arith.constant 0 : i32
    %c0_i32_1 = arith.constant 0 : i32
    return %arg0, %arg2, %c0_i32, %c0_i32_0 : i32, i32, i32, i32
  }
  func.func @transform_4(%arg0: i32, %arg1: i32, %arg2: i32) -> (i32, i32, i32) {
    %c0_i32 = arith.constant 0 : i32
    %c0_i32_0 = arith.constant 0 : i32
    %c0_i32_1 = arith.constant 0 : i32
    return %arg2, %c0_i32, %c0_i32_0 : i32, i32, i32
  }
  func.func @transform_5(%arg0: i32, %arg1: i32, %arg2: i32) -> (i32, i32) {
    %c0_i32 = arith.constant 0 : i32
    %c0_i32_0 = arith.constant 0 : i32
    %c0_i32_1 = arith.constant 0 : i32
    return %c0_i32, %c0_i32_0 : i32, i32
  }
  func.func @transform_6(%arg0: i32, %arg1: i32, %arg2: i32) -> (i32, i32, i32) {
    %c0_i32 = arith.constant 0 : i32
    %c0_i32_0 = arith.constant 0 : i32
    return %arg0, %arg1, %c0_i32 : i32, i32, i32
  }
}

module attributes {stable_mosaic.version = 11 : i64} {
  func.func @mlp_kernel(%arg0: i32, %arg1: i32, %arg2: memref<1x8x32xf32, #tpu.memory_space<vmem>>, %arg3: memref<1x32xf32, #tpu.memory_space<vmem>>, %arg4: memref<1x32xf32, #tpu.memory_space<vmem>>, %arg5: memref<32x128xbf16, #tpu.memory_space<vmem>>, %arg6: memref<1x128xf32, #tpu.memory_space<vmem>>, %arg7: memref<128x32xbf16, #tpu.memory_space<vmem>>, %arg8: memref<1x32xf32, #tpu.memory_space<vmem>>, %arg9: memref<1x8x32xf32, #tpu.memory_space<vmem>>, %arg10: memref<8x32xbf16, #tpu.memory_space<vmem>>, %arg11: memref<8x32xf32, #tpu.memory_space<vmem>>) attributes {dimension_semantics = [#tpu.dimension_semantics<parallel>, #tpu.dimension_semantics<arbitrary>], iteration_bounds = array<i64: 2, 1>, scalar_prefetch = 0 : i64, scratch_operands = 2 : i64, tpu.core_type = #tpu.core_type<tc>, window_params = [{transform_indices = @transform_0, window_bounds = array<i64: 1, 8, 32>}, {pipeline_mode = #tpu.pipeline_mode<synchronous>, transform_indices = @transform_1, window_bounds = array<i64: 1, 32>}, {pipeline_mode = #tpu.pipeline_mode<synchronous>, transform_indices = @transform_2, window_bounds = array<i64: 1, 32>}, {transform_indices = @transform_3, window_bounds = array<i64: 32, 128>}, {transform_indices = @transform_4, window_bounds = array<i64: 1, 128>}, {transform_indices = @transform_5, window_bounds = array<i64: 128, 32>}, {pipeline_mode = #tpu.pipeline_mode<synchronous>, transform_indices = @transform_6, window_bounds = array<i64: 1, 32>}, {transform_indices = @transform_7, window_bounds = array<i64: 1, 8, 32>}]} {
    %c0_i32 = arith.constant 0 : i32
    %0 = arith.cmpi eq, %arg1, %c0_i32 : i32
    %1 = arith.extui %0 : i1 to i32
    %c0_i32_0 = arith.constant 0 : i32
    %2 = arith.cmpi ne, %1, %c0_i32_0 : i32
    scf.if %2 {
      %c0_19 = arith.constant 0 : index
      %c0_20 = arith.constant 0 : index
      %c0_21 = arith.constant 0 : index
      %33 = vector.load %arg2[%c0_19, %c0_20, %c0_21] : memref<1x8x32xf32, #tpu.memory_space<vmem>>, vector<1x8x32xf32>
      %34 = vector.shape_cast %33 : vector<1x8x32xf32> to vector<8x32xf32>
      %c0_22 = arith.constant 0 : index
      %c0_23 = arith.constant 0 : index
      %35 = vector.load %arg3[%c0_22, %c0_23] : memref<1x32xf32, #tpu.memory_space<vmem>>, vector<1x32xf32>
      %36 = vector.shape_cast %35 : vector<1x32xf32> to vector<32xf32>
      %c0_24 = arith.constant 0 : index
      %c0_25 = arith.constant 0 : index
      %37 = vector.load %arg4[%c0_24, %c0_25] : memref<1x32xf32, #tpu.memory_space<vmem>>, vector<1x32xf32>
      %38 = vector.shape_cast %37 : vector<1x32xf32> to vector<32xf32>
      %cst_26 = arith.constant dense<0.000000e+00> : vector<8xf32>
      %39 = vector.multi_reduction <add>, %34, %cst_26 [1] : vector<8x32xf32> to vector<8xf32>
      %40 = vector.shape_cast %39 : vector<8xf32> to vector<8x1xf32>
      %cst_27 = arith.constant 3.200000e+01 : f32
      %41 = vector.broadcast %cst_27 : f32 to vector<8x1xf32>
      %42 = arith.divf %40, %41 : vector<8x1xf32>
      %43 = vector.broadcast %42 : vector<8x1xf32> to vector<8x32xf32>
      %44 = arith.subf %34, %43 : vector<8x32xf32>
      %45 = arith.mulf %44, %44 : vector<8x32xf32>
      %cst_28 = arith.constant dense<0.000000e+00> : vector<8xf32>
      %46 = vector.multi_reduction <add>, %45, %cst_28 [1] : vector<8x32xf32> to vector<8xf32>
      %47 = vector.shape_cast %46 : vector<8xf32> to vector<8x1xf32>
      %cst_29 = arith.constant 3.200000e+01 : f32
      %48 = vector.broadcast %cst_29 : f32 to vector<8x1xf32>
      %49 = arith.divf %47, %48 : vector<8x1xf32>
      %cst_30 = arith.constant 9.99999974E-6 : f32
      %50 = vector.broadcast %cst_30 : f32 to vector<8x1xf32>
      %51 = arith.addf %49, %50 : vector<8x1xf32>
      %52 = math.rsqrt %51 : vector<8x1xf32>
      %53 = vector.broadcast %52 : vector<8x1xf32> to vector<8x32xf32>
      %54 = arith.mulf %44, %53 : vector<8x32xf32>
      %55 = vector.shape_cast %36 : vector<32xf32> to vector<1x32xf32>
      %56 = vector.broadcast %55 : vector<1x32xf32> to vector<8x32xf32>
      %57 = arith.mulf %54, %56 : vector<8x32xf32>
      %58 = vector.shape_cast %38 : vector<32xf32> to vector<1x32xf32>
      %59 = vector.broadcast %58 : vector<1x32xf32> to vector<8x32xf32>
      %60 = arith.addf %57, %59 : vector<8x32xf32>
      %61 = arith.truncf %60 : vector<8x32xf32> to vector<8x32xbf16>
      %c0_31 = arith.constant 0 : index
      %c0_32 = arith.constant 0 : index
      %62 = vector.load %arg10[%c0_31, %c0_32] : memref<8x32xbf16, #tpu.memory_space<vmem>>, vector<8x32xbf16>
      tpu.vector_store %arg10[%c0_31, %c0_32], %61 {strides = array<i32>} : memref<8x32xbf16, #tpu.memory_space<vmem>>, vector<8x32xbf16>,
      %cst_33 = arith.constant 0.000000e+00 : f32
      %63 = vector.broadcast %cst_33 : f32 to vector<8x32xf32>
      %c0_34 = arith.constant 0 : index
      %c0_35 = arith.constant 0 : index
      %64 = vector.load %arg11[%c0_34, %c0_35] : memref<8x32xf32, #tpu.memory_space<vmem>>, vector<8x32xf32>
      tpu.vector_store %arg11[%c0_34, %c0_35], %63 {strides = array<i32>} : memref<8x32xf32, #tpu.memory_space<vmem>>, vector<8x32xf32>,
    } else {
    }
    %c0 = arith.constant 0 : index
    %c0_1 = arith.constant 0 : index
    %3 = vector.load %arg10[%c0, %c0_1] : memref<8x32xbf16, #tpu.memory_space<vmem>>, vector<8x32xbf16>
    %c0_2 = arith.constant 0 : index
    %c0_3 = arith.constant 0 : index
    %4 = vector.load %arg5[%c0_2, %c0_3] : memref<32x128xbf16, #tpu.memory_space<vmem>>, vector<32x128xbf16>
    %cst = arith.constant dense<0.000000e+00> : vector<8x128xf32>
    %5 = tpu.matmul %3, %4, %cst {dimension_numbers = #tpu.dot_dimension_numbers<[1], [0], [0], [1], [0, 0, 1, 1], [], []>} : vector<8x32xbf16>, vector<32x128xbf16>, vector<8x128xf32> -> vector<8x128xf32>
    %c0_4 = arith.constant 0 : index
    %c0_5 = arith.constant 0 : index
    %6 = vector.load %arg6[%c0_4, %c0_5] : memref<1x128xf32, #tpu.memory_space<vmem>>, vector<1x128xf32>
    %7 = vector.shape_cast %6 : vector<1x128xf32> to vector<128xf32>
    %8 = vector.shape_cast %7 : vector<128xf32> to vector<1x128xf32>
    %9 = vector.broadcast %8 : vector<1x128xf32> to vector<8x128xf32>
    %10 = arith.addf %5, %9 : vector<8x128xf32>
    %11 = arith.mulf %10, %10 : vector<8x128xf32>
    %12 = arith.mulf %10, %11 : vector<8x128xf32>
    %cst_6 = arith.constant 4.471500e-02 : f32
    %13 = vector.broadcast %cst_6 : f32 to vector<8x128xf32>
    %14 = arith.mulf %13, %12 : vector<8x128xf32>
    %15 = arith.addf %10, %14 : vector<8x128xf32>
    %cst_7 = arith.constant 0.797884583 : f32
    %16 = vector.broadcast %cst_7 : f32 to vector<8x128xf32>
    %17 = arith.mulf %16, %15 : vector<8x128xf32>
    %18 = math.tanh %17 : vector<8x128xf32>
    %cst_8 = arith.constant 1.000000e+00 : f32
    %19 = vector.broadcast %cst_8 : f32 to vector<8x128xf32>
    %20 = arith.addf %19, %18 : vector<8x128xf32>
    %cst_9 = arith.constant 5.000000e-01 : f32
    %21 = vector.broadcast %cst_9 : f32 to vector<8x128xf32>
    %22 = arith.mulf %21, %20 : vector<8x128xf32>
    %23 = arith.mulf %10, %22 : vector<8x128xf32>
    %c0_10 = arith.constant 0 : index
    %c0_11 = arith.constant 0 : index
    %24 = vector.load %arg11[%c0_10, %c0_11] : memref<8x32xf32, #tpu.memory_space<vmem>>, vector<8x32xf32>
    %25 = arith.truncf %23 : vector<8x128xf32> to vector<8x128xbf16>
    %c0_12 = arith.constant 0 : index
    %c0_13 = arith.constant 0 : index
    %26 = vector.load %arg7[%c0_12, %c0_13] : memref<128x32xbf16, #tpu.memory_space<vmem>>, vector<128x32xbf16>
    %cst_14 = arith.constant dense<0.000000e+00> : vector<8x32xf32>
    %27 = tpu.matmul %25, %26, %cst_14 {dimension_numbers = #tpu.dot_dimension_numbers<[1], [0], [0], [1], [0, 0, 1, 1], [], []>} : vector<8x128xbf16>, vector<128x32xbf16>, vector<8x32xf32> -> vector<8x32xf32>
    %28 = arith.addf %24, %27 : vector<8x32xf32>
    %c0_15 = arith.constant 0 : index
    %c0_16 = arith.constant 0 : index
    %29 = vector.load %arg11[%c0_15, %c0_16] : memref<8x32xf32, #tpu.memory_space<vmem>>, vector<8x32xf32>
    tpu.vector_store %arg11[%c0_15, %c0_16], %28 {strides = array<i32>} : memref<8x32xf32, #tpu.memory_space<vmem>>, vector<8x32xf32>,
    %c0_i32_17 = arith.constant 0 : i32
    %30 = arith.cmpi eq, %arg1, %c0_i32_17 : i32
    %31 = arith.extui %30 : i1 to i32
    %c0_i32_18 = arith.constant 0 : i32
    %32 = arith.cmpi ne, %31, %c0_i32_18 : i32
    scf.if %32 {
      %c0_19 = arith.constant 0 : index
      %c0_20 = arith.constant 0 : index
      %c0_21 = arith.constant 0 : index
      %33 = vector.load %arg2[%c0_19, %c0_20, %c0_21] : memref<1x8x32xf32, #tpu.memory_space<vmem>>, vector<1x8x32xf32>
      %34 = vector.shape_cast %33 : vector<1x8x32xf32> to vector<8x32xf32>
      %c0_22 = arith.constant 0 : index
      %c0_23 = arith.constant 0 : index
      %35 = vector.load %arg11[%c0_22, %c0_23] : memref<8x32xf32, #tpu.memory_space<vmem>>, vector<8x32xf32>
      %36 = arith.addf %34, %35 : vector<8x32xf32>
      %c0_24 = arith.constant 0 : index
      %c0_25 = arith.constant 0 : index
      %37 = vector.load %arg8[%c0_24, %c0_25] : memref<1x32xf32, #tpu.memory_space<vmem>>, vector<1x32xf32>
      %38 = vector.shape_cast %37 : vector<1x32xf32> to vector<32xf32>
      %39 = vector.shape_cast %38 : vector<32xf32> to vector<1x32xf32>
      %40 = vector.broadcast %39 : vector<1x32xf32> to vector<8x32xf32>
      %41 = arith.addf %36, %40 : vector<8x32xf32>
      %c0_26 = arith.constant 0 : index
      %c0_27 = arith.constant 0 : index
      %c0_28 = arith.constant 0 : index
      %42 = vector.load %arg9[%c0_26, %c0_27, %c0_28] : memref<1x8x32xf32, #tpu.memory_space<vmem>>, vector<1x8x32xf32>
      %43 = vector.shape_cast %42 : vector<1x8x32xf32> to vector<8x32xf32>
      %44 = vector.shape_cast %41 : vector<8x32xf32> to vector<1x8x32xf32>
      tpu.vector_store %arg9[%c0_26, %c0_27, %c0_28], %44 {strides = array<i32>} : memref<1x8x32xf32, #tpu.memory_space<vmem>>, vector<1x8x32xf32>,
    } else {
    }
    return
  }
  func.func @transform_0(%arg0: i32, %arg1: i32) -> (i32, i32, i32) {
    %c0_i32 = arith.constant 0 : i32
    %c0_i32_0 = arith.constant 0 : i32
    %c0_i32_1 = arith.constant 0 : i32
    return %arg0, %c0_i32, %c0_i32_0 : i32, i32, i32
  }
  func.func @transform_1(%arg0: i32, %arg1: i32) -> (i32, i32) {
    %c0_i32 = arith.constant 0 : i32
    %c0_i32_0 = arith.constant 0 : i32
    %c0_i32_1 = arith.constant 0 : i32
    return %c0_i32, %c0_i32_0 : i32, i32
  }
  func.func @transform_2(%arg0: i32, %arg1: i32) -> (i32, i32) {
    %c0_i32 = arith.constant 0 : i32
    %c0_i32_0 = arith.constant 0 : i32
    %c0_i32_1 = arith.constant 0 : i32
    return %c0_i32, %c0_i32_0 : i32, i32
  }
  func.func @transform_3(%arg0: i32, %arg1: i32) -> (i32, i32) {
    %c0_i32 = arith.constant 0 : i32
    %c0_i32_0 = arith.constant 0 : i32
    return %c0_i32, %arg1 : i32, i32
  }
  func.func @transform_4(%arg0: i32, %arg1: i32) -> (i32, i32) {
    %c0_i32 = arith.constant 0 : i32
    %c0_i32_0 = arith.constant 0 : i32
    return %c0_i32, %arg1 : i32, i32
  }
  func.func @transform_5(%arg0: i32, %arg1: i32) -> (i32, i32) {
    %c0_i32 = arith.constant 0 : i32
    %c0_i32_0 = arith.constant 0 : i32
    return %arg1, %c0_i32 : i32, i32
  }
  func.func @transform_6(%arg0: i32, %arg1: i32) -> (i32, i32) {
    %c0_i32 = arith.constant 0 : i32
    %c0_i32_0 = arith.constant 0 : i32
    %c0_i32_1 = arith.constant 0 : i32
    return %c0_i32, %c0_i32_0 : i32, i32
  }
  func.func @transform_7(%arg0: i32, %arg1: i32) -> (i32, i32, i32) {
    %c0_i32 = arith.constant 0 : i32
    %c0_i32_0 = arith.constant 0 : i32
    %c0_i32_1 = arith.constant 0 : i32
    return %arg0, %c0_i32, %c0_i32_0 : i32, i32, i32
  }
}

module attributes {stable_mosaic.version = 11 : i64} {
  func.func @head_kernel(%arg0: i32, %arg1: memref<2x32xbf16, #tpu.memory_space<vmem>>, %arg2: memref<32x64xbf16, #tpu.memory_space<vmem>>, %arg3: memref<2x64xf32, #tpu.memory_space<vmem>>) attributes {dimension_semantics = [#tpu.dimension_semantics<parallel>], iteration_bounds = array<i64: 1>, scalar_prefetch = 0 : i64, scratch_operands = 0 : i64, tpu.core_type = #tpu.core_type<tc>, window_params = [{pipeline_mode = #tpu.pipeline_mode<synchronous>, transform_indices = @transform_0, window_bounds = array<i64: 2, 32>}, {transform_indices = @transform_1, window_bounds = array<i64: 32, 64>}, {transform_indices = @transform_2, window_bounds = array<i64: 2, 64>}]} {
    %c0 = arith.constant 0 : index
    %c0_0 = arith.constant 0 : index
    %0 = vector.load %arg1[%c0, %c0_0] : memref<2x32xbf16, #tpu.memory_space<vmem>>, vector<2x32xbf16>
    %c0_1 = arith.constant 0 : index
    %c0_2 = arith.constant 0 : index
    %1 = vector.load %arg2[%c0_1, %c0_2] : memref<32x64xbf16, #tpu.memory_space<vmem>>, vector<32x64xbf16>
    %cst = arith.constant dense<0.000000e+00> : vector<2x64xf32>
    %2 = tpu.matmul %0, %1, %cst {dimension_numbers = #tpu.dot_dimension_numbers<[1], [0], [0], [1], [0, 0, 1, 1], [], []>} : vector<2x32xbf16>, vector<32x64xbf16>, vector<2x64xf32> -> vector<2x64xf32>
    %c0_3 = arith.constant 0 : index
    %c0_4 = arith.constant 0 : index
    %3 = vector.load %arg3[%c0_3, %c0_4] : memref<2x64xf32, #tpu.memory_space<vmem>>, vector<2x64xf32>
    tpu.vector_store %arg3[%c0_3, %c0_4], %2 {strides = array<i32>} : memref<2x64xf32, #tpu.memory_space<vmem>>, vector<2x64xf32>,
    return
  }
  func.func @transform_0(%arg0: i32) -> (i32, i32) {
    %c0_i32 = arith.constant 0 : i32
    %c0_i32_0 = arith.constant 0 : i32
    %c0_i32_1 = arith.constant 0 : i32
    return %c0_i32, %c0_i32_0 : i32, i32
  }
  func.func @transform_1(%arg0: i32) -> (i32, i32) {
    %c0_i32 = arith.constant 0 : i32
    %c0_i32_0 = arith.constant 0 : i32
    return %c0_i32, %arg0 : i32, i32
  }
  func.func @transform_2(%arg0: i32) -> (i32, i32) {
    %c0_i32 = arith.constant 0 : i32
    %c0_i32_0 = arith.constant 0 : i32
    return %c0_i32, %arg0 : i32, i32
  }
}

</mosaic_0001>

<llo_original>
// kernel: gpt_forward.7
$region0: #{gpt_forward.7}
  #allocation0 [shape = 'u32[]', space=smem, size = 0x4, offset = 0x4, fixed_abs, tag = 'smem constant byte address 0x4 - core index']
  #allocation1 [shape = 'u32[72,128]{1,0:T(1,128)}', space=vmem, size = 0x9000, scoped, tag = 'internal scratch']
  #allocation2 [shape = 'bf16[8,32]{1,0:T(8,128)(2,1)}', space=vmem, size = 0x800, scoped, tag = 'scratch operand']
  %s0 = inlined_call_operand.vmem [shape: f32[2,8,32], index: 0, kind: input, shape index: {}]
  %s1 = inlined_call_operand.vmem [shape: f32[1,32], index: 1, kind: input, shape index: {}]
  %s2 = inlined_call_operand.vmem [shape: f32[1,32], index: 2, kind: input, shape index: {}]
  %s3 = inlined_call_operand.vmem [shape: bf16[4,32,24], index: 3, kind: input, shape index: {}]
  %s4 = inlined_call_operand.vmem [shape: f32[4,1,24], index: 4, kind: input, shape index: {}]
  %s5 = inlined_call_operand.vmem [shape: bf16[2,4,8,8], index: 5, kind: output, shape index: {0}]
  %s6 = inlined_call_operand.vmem [shape: bf16[2,4,8,8], index: 6, kind: output, shape index: {1}]
  %s7 = inlined_call_operand.vmem [shape: bf16[2,4,8,8], index: 7, kind: output, shape index: {2}]
  %8 = xla_tuple %s5, %s6, %s7
  %s9 = sld [smem:[#allocation0]]
  $region73: #{gpt_forward.7} parent=0
    _
  %s11 = ssub.s32 1, %s9
  %s12 = scalar_select 0, %s11, %s9
  loop: start=0, step=1, limit=10
  $region2: #{gpt_forward.7} parent=0 // loop_pre_header
    _
  $region3: #{gpt_forward.7} parent=0 // loop_header
    %s14 = sphi 0, %s18
    %p15 = scmp.ge.s32.totalorder %s14, 10
    %s21 = sphi 0, %s33
    %s22 = sphi 0, %s29
    %s23 = sphi 0, %s21
    %s24 = sphi 0, %s22
    %s25 = sphi 0, %s23
    %s26 = sphi 0, %s24
    %s36 = sphi 0, %s38
    %s39 = sphi 0, %s36
    %s40 = sphi 0, %s39
    %s56 = sphi 0, %s40
    %s60 = sphi 0, %s60
    %s62 = sphi 0, %s60
    %s63 = sphi 0, %s62
    %s77 = sphi 0, %s63
    %s81 = sphi 0, %s81
    %s83 = sphi 0, %s81
    %s84 = sphi 0, %s83
    %s98 = sphi 0, %s84
    %s104 = sphi 0, %s106
    %s107 = sphi 0, %s104
    %s108 = sphi 0, %s107
    %s124 = sphi 0, %s108
    %s130 = sphi 0, %s132
    %s133 = sphi 0, %s130
    %s134 = sphi 0, %s133
    %s150 = sphi 0, %s134
    %s158 = sphi 0, %s160
    %s161 = sphi 0, %s158
    %s162 = sphi 0, %s161
    %s178 = sphi 0, %s162
    %s186 = sphi 0, %s188
    %s189 = sphi 0, %s186
    %s190 = sphi 0, %s189
    %s206 = sphi 0, %s190
    %s214 = sphi 0, %s216
    %s217 = sphi 0, %s214
    %s218 = sphi 0, %s217
    %s234 = sphi 0, %s218
  $region4: #{gpt_forward.7} parent=0 // loop_header_branch
    %17 = sbr.rel (%p15) target = $region8
  $region5: #{gpt_forward.7} parent=0 // loop_body
    %s19 = ssub.s32 %s14, 1
    %s20 = ssub.s32 %s14, 2
    %s27 = sadd.s32 1, %s22
    %p28 = scmp.ge.s32.totalorder %s27, 4
    %s29 = scalar_select %p28, 0, %s27
    %s30 = sadd.s32 1, %s21
    %s31 = scalar_select %p28, %s30, %s21
    %p32 = scmp.ge.s32.totalorder %s31, 2
    %s33 = scalar_select %p32, 0, %s31
    %s34 = ssub.s32 %s21, %s33
    %p35 = scmp.eq.s32.totalorder %s34, 0
    %s37 = sadd.s32 %s36, 1
    %s38 = scalar_select %p35, %s36, %s37
    %p41 = pneg %p35
    %p42 = scmp.eq.s32.totalorder %s14, 7
    %p43 = por %p41, %p42
    %p44 = scmp.ne.s32.totalorder %s36, %s39
    %p45 = scmp.eq.s32.totalorder %s14, 0
    %p46 = por %p44, %p45
    %p47 = scmp.ne.s32.totalorder %s36, %s39
    %p48 = scmp.eq.s32.totalorder %s19, 7
    %p49 = por %p47, %p48
    %p50 = scmp.ne.s32.totalorder %s39, %s40
    %p51 = scmp.eq.s32.totalorder %s19, 0
    %p52 = por %p50, %p51
    %p53 = scmp.ne.s32.totalorder %s39, %s40
    %p54 = scmp.eq.s32.totalorder %s20, 7
    %p55 = por %p53, %p54
    %p57 = scmp.ne.s32.totalorder %s40, %s56
    %p58 = scmp.eq.s32.totalorder %s20, 0
    %p59 = por %p57, %p58
    %s61 = sadd.s32 %s60, 1
    %p64 = scmp.eq.s32.totalorder %s14, 7
    %p65 = scmp.ne.s32.totalorder %s60, %s62
    %p66 = scmp.eq.s32.totalorder %s14, 0
    %p67 = por %p65, %p66
    %p68 = scmp.ne.s32.totalorder %s60, %s62
    %p69 = scmp.eq.s32.totalorder %s19, 7
    %p70 = por %p68, %p69
    %p71 = scmp.ne.s32.totalorder %s62, %s63
    %p72 = scmp.eq.s32.totalorder %s19, 0
    %p73 = por %p71, %p72
    %p74 = scmp.ne.s32.totalorder %s62, %s63
    %p75 = scmp.eq.s32.totalorder %s20, 7
    %p76 = por %p74, %p75
    %p78 = scmp.ne.s32.totalorder %s63, %s77
    %p79 = scmp.eq.s32.totalorder %s20, 0
    %p80 = por %p78, %p79
    %s82 = sadd.s32 %s81, 1
    %p85 = scmp.eq.s32.totalorder %s14, 7
    %p86 = scmp.ne.s32.totalorder %s81, %s83
    %p87 = scmp.eq.s32.totalorder %s14, 0
    %p88 = por %p86, %p87
    %p89 = scmp.ne.s32.totalorder %s81, %s83
    %p90 = scmp.eq.s32.totalorder %s19, 7
    %p91 = por %p89, %p90
    %p92 = scmp.ne.s32.totalorder %s83, %s84
    %p93 = scmp.eq.s32.totalorder %s19, 0
    %p94 = por %p92, %p93
    %p95 = scmp.ne.s32.totalorder %s83, %s84
    %p96 = scmp.eq.s32.totalorder %s20, 7
    %p97 = por %p95, %p96
    %p99 = scmp.ne.s32.totalorder %s84, %s98
    %p100 = scmp.eq.s32.totalorder %s20, 0
    %p101 = por %p99, %p100
    %s102 = ssub.s32 %s22, %s29
    %p103 = scmp.eq.s32.totalorder %s102, 0
    %s105 = sadd.s32 %s104, 1
    %s106 = scalar_select %p103, %s104, %s105
    %p109 = pneg %p103
    %p110 = scmp.eq.s32.totalorder %s14, 7
    %p111 = por %p109, %p110
    %p112 = scmp.ne.s32.totalorder %s104, %s107
    %p113 = scmp.eq.s32.totalorder %s14, 0
    %p114 = por %p112, %p113
    %p115 = scmp.ne.s32.totalorder %s104, %s107
    %p116 = scmp.eq.s32.totalorder %s19, 7
    %p117 = por %p115, %p116
    %p118 = scmp.ne.s32.totalorder %s107, %s108
    %p119 = scmp.eq.s32.totalorder %s19, 0
    %p120 = por %p118, %p119
    %p121 = scmp.ne.s32.totalorder %s107, %s108
    %p122 = scmp.eq.s32.totalorder %s20, 7
    %p123 = por %p121, %p122
    %p125 = scmp.ne.s32.totalorder %s108, %s124
    %p126 = scmp.eq.s32.totalorder %s20, 0
    %p127 = por %p125, %p126
    %s128 = ssub.s32 %s22, %s29
    %p129 = scmp.eq.s32.totalorder %s128, 0
    %s131 = sadd.s32 %s130, 1
    %s132 = scalar_select %p129, %s130, %s131
    %p135 = pneg %p129
    %p136 = scmp.eq.s32.totalorder %s14, 7
    %p137 = por %p135, %p136
    %p138 = scmp.ne.s32.totalorder %s130, %s133
    %p139 = scmp.eq.s32.totalorder %s14, 0
    %p140 = por %p138, %p139
    %p141 = scmp.ne.s32.totalorder %s130, %s133
    %p142 = scmp.eq.s32.totalorder %s19, 7
    %p143 = por %p141, %p142
    %p144 = scmp.ne.s32.totalorder %s133, %s134
    %p145 = scmp.eq.s32.totalorder %s19, 0
    %p146 = por %p144, %p145
    %p147 = scmp.ne.s32.totalorder %s133, %s134
    %p148 = scmp.eq.s32.totalorder %s20, 7
    %p149 = por %p147, %p148
    %p151 = scmp.ne.s32.totalorder %s134, %s150
    %p152 = scmp.eq.s32.totalorder %s20, 0
    %p153 = por %p151, %p152
    %s154 = ssub.s32 %s21, %s33
    %s155 = ssub.s32 %s22, %s29
    %s156 = sor.u32 %s154, %s155
    %p157 = scmp.eq.s32.totalorder %s156, 0
    %s159 = sadd.s32 %s158, 1
    %s160 = scalar_select %p157, %s158, %s159
    %p163 = pneg %p157
    %p164 = scmp.eq.s32.totalorder %s14, 7
    %p165 = por %p163, %p164
    %p166 = scmp.ne.s32.totalorder %s158, %s161
    %p167 = scmp.eq.s32.totalorder %s14, 0
    %p168 = por %p166, %p167
    %p169 = scmp.ne.s32.totalorder %s158, %s161
    %p170 = scmp.eq.s32.totalorder %s19, 7
    %p171 = por %p169, %p170
    %p172 = scmp.ne.s32.totalorder %s161, %s162
    %p173 = scmp.eq.s32.totalorder %s19, 0
    %p174 = por %p172, %p173
    %p175 = scmp.ne.s32.totalorder %s161, %s162
    %p176 = scmp.eq.s32.totalorder %s20, 7
    %p177 = por %p175, %p176
    %p179 = scmp.ne.s32.totalorder %s162, %s178
    %p180 = scmp.eq.s32.totalorder %s20, 0
    %p181 = por %p179, %p180
    %s182 = ssub.s32 %s21, %s33
    %s183 = ssub.s32 %s22, %s29
    %s184 = sor.u32 %s182, %s183
    %p185 = scmp.eq.s32.totalorder %s184, 0
    %s187 = sadd.s32 %s186, 1
    %s188 = scalar_select %p185, %s186, %s187
    %p191 = pneg %p185
    %p192 = scmp.eq.s32.totalorder %s14, 7
    %p193 = por %p191, %p192
    %p194 = scmp.ne.s32.totalorder %s186, %s189
    %p195 = scmp.eq.s32.totalorder %s14, 0
    %p196 = por %p194, %p195
    %p197 = scmp.ne.s32.totalorder %s186, %s189
    %p198 = scmp.eq.s32.totalorder %s19, 7
    %p199 = por %p197, %p198
    %p200 = scmp.ne.s32.totalorder %s189, %s190
    %p201 = scmp.eq.s32.totalorder %s19, 0
    %p202 = por %p200, %p201
    %p203 = scmp.ne.s32.totalorder %s189, %s190
    %p204 = scmp.eq.s32.totalorder %s20, 7
    %p205 = por %p203, %p204
    %p207 = scmp.ne.s32.totalorder %s190, %s206
    %p208 = scmp.eq.s32.totalorder %s20, 0
    %p209 = por %p207, %p208
    %s210 = ssub.s32 %s21, %s33
    %s211 = ssub.s32 %s22, %s29
    %s212 = sor.u32 %s210, %s211
    %p213 = scmp.eq.s32.totalorder %s212, 0
    %s215 = sadd.s32 %s214, 1
    %s216 = scalar_select %p213, %s214, %s215
    %p219 = pneg %p213
    %p220 = scmp.eq.s32.totalorder %s14, 7
    %p221 = por %p219, %p220
    %p222 = scmp.ne.s32.totalorder %s214, %s217
    %p223 = scmp.eq.s32.totalorder %s14, 0
    %p224 = por %p222, %p223
    %p225 = scmp.ne.s32.totalorder %s214, %s217
    %p226 = scmp.eq.s32.totalorder %s19, 7
    %p227 = por %p225, %p226
    %p228 = scmp.ne.s32.totalorder %s217, %s218
    %p229 = scmp.eq.s32.totalorder %s19, 0
    %p230 = por %p228, %p229
    %p231 = scmp.ne.s32.totalorder %s217, %s218
    %p232 = scmp.eq.s32.totalorder %s20, 7
    %p233 = por %p231, %p232
    %p235 = scmp.ne.s32.totalorder %s218, %s234
    %p236 = scmp.eq.s32.totalorder %s20, 0
    %p237 = por %p235, %p236
    %p238 = scmp.le.s32.totalorder 1, %s14
    %p239 = scmp.lt.s32.totalorder %s14, 9
    %p240 = pnand %p238, %p239
    %p241 = pneg %p240
    // Predicated region
    $region9: #{gpt_forward.7} parent=5 // pred_check
      _
    $region10: #{gpt_forward.7} parent=5 // pred_check_branch
      %243 = sbr.rel (%p240) target = $region12
    $region11: #{gpt_forward.7} parent=5 // pred_region
      %s244 = ssub.s32 %s14, 1
      // Predicated region
      $region13: #{gpt_forward.7} parent=11 // pred_check
        %p245 = pneg %p73
      $region14: #{gpt_forward.7} parent=11 // pred_check_branch
        %247 = sbr.rel (%p245) target = $region16
      $region15: #{gpt_forward.7} parent=11 // pred_region
        _
      $region16: #{gpt_forward.7} parent=11 // pred_fallthru
        _
      // Predicated region
      $region17: #{gpt_forward.7} parent=11 // pred_check
        %p248 = pneg %p94
      $region18: #{gpt_forward.7} parent=11 // pred_check_branch
        %250 = sbr.rel (%p248) target = $region20
      $region19: #{gpt_forward.7} parent=11 // pred_region
        _
      $region20: #{gpt_forward.7} parent=11 // pred_fallthru
        _
    $region12: #{gpt_forward.7} parent=5 // pred_fallthru
      _
    %p251 = scmp.lt.s32.totalorder %s14, 8
    // Predicated region
    $region21: #{gpt_forward.7} parent=5 // pred_check
      %p252 = pneg %p251
    $region22: #{gpt_forward.7} parent=5 // pred_check_branch
      %254 = sbr.rel (%p252) target = $region24
    $region23: #{gpt_forward.7} parent=5 // pred_region
      // Predicated region
      $region25: #{gpt_forward.7} parent=23 // pred_check
        %p255 = pneg %p46
      $region26: #{gpt_forward.7} parent=23 // pred_check_branch
        %257 = sbr.rel (%p255) target = $region28
      $region27: #{gpt_forward.7} parent=23 // pred_region
        %p258 = scmp.lt.s32.totalorder %s21, 1
        %s259 = scalar_select %p258, %s21, 1
        %s260 = smul.addr %s259, 8
        %s261 = scalar_lea.vmem %s0, %s260
      $region28: #{gpt_forward.7} parent=23 // pred_fallthru
        _
      // Predicated region
      $region29: #{gpt_forward.7} parent=23 // pred_check
        %p262 = pneg %p114
      $region30: #{gpt_forward.7} parent=23 // pred_check_branch
        %264 = sbr.rel (%p262) target = $region32
      $region31: #{gpt_forward.7} parent=23 // pred_region
        %p265 = scmp.lt.s32.totalorder %s22, 3
        %s266 = scalar_select %p265, %s22, 3
        %s267 = smul.addr %s266, 4
        %s268 = smul.addr %s267, 4
        %s269 = scalar_lea.vmem %s3, %s268
      $region32: #{gpt_forward.7} parent=23 // pred_fallthru
        _
      // Predicated region
      $region33: #{gpt_forward.7} parent=23 // pred_check
        %p270 = pneg %p140
      $region34: #{gpt_forward.7} parent=23 // pred_check_branch
        %272 = sbr.rel (%p270) target = $region36
      $region35: #{gpt_forward.7} parent=23 // pred_region
        %p273 = scmp.lt.s32.totalorder %s22, 3
        %s274 = scalar_select %p273, %s22, 3
        %s275 = scalar_lea.vmem %s4, %s274
      $region36: #{gpt_forward.7} parent=23 // pred_fallthru
        _
    $region24: #{gpt_forward.7} parent=5 // pred_fallthru
      _
    %p276 = scmp.le.s32.totalorder 1, %s14
    %p277 = scmp.lt.s32.totalorder %s14, 9
    %p278 = pnand %p276, %p277
    %p279 = pneg %p278
    // Predicated region
    $region37: #{gpt_forward.7} parent=5 // pred_check
      _
    $region38: #{gpt_forward.7} parent=5 // pred_check_branch
      %281 = sbr.rel (%p278) target = $region40
    $region39: #{gpt_forward.7} parent=5 // pred_region
      %s282 = ssub.s32 %s14, 1
      %p283 = scmp.lt.s32.totalorder %s23, 1
      %s284 = scalar_select %p283, %s23, 1
      %s285 = smul.addr %s284, 8
      %s286 = scalar_lea.vmem %s0, %s285
      %p287 = pneg %p52
      %p288 = pneg %p49
      %p289 = pneg %p73
      %p290 = pneg %p70
      %p291 = pneg %p94
      %p292 = pneg %p91
      %p293 = scmp.lt.s32.totalorder %s24, 3
      %s294 = scalar_select %p293, %s24, 3
      %s295 = smul.addr %s294, 4
      %s296 = smul.addr %s295, 4
      %s297 = scalar_lea.vmem %s3, %s296
      %p298 = pneg %p120
      %p299 = pneg %p117
      %p300 = scmp.lt.s32.totalorder %s24, 3
      %s301 = scalar_select %p300, %s24, 3
      %s302 = scalar_lea.vmem %s4, %s301
      %p303 = pneg %p146
      %p304 = pneg %p143
      %p305 = pneg %p174
      %p306 = pneg %p171
      %p307 = scmp.lt.s32.totalorder %s23, 1
      %s308 = scalar_select %p307, %s23, 1
      %p309 = scmp.lt.s32.totalorder %s24, 3
      %s310 = scalar_select %p309, %s24, 3
      %s311 = smul.addr %s308, 4
      %s312 = sadd.s32 %s310, %s311
      %s313 = smul.addr %s312, 4
      %s314 = scalar_lea.vmem %s5, %s313
      %p315 = pneg %p202
      %p316 = pneg %p199
      %p317 = scmp.lt.s32.totalorder %s23, 1
      %s318 = scalar_select %p317, %s23, 1
      %p319 = scmp.lt.s32.totalorder %s24, 3
      %s320 = scalar_select %p319, %s24, 3
      %s321 = smul.addr %s318, 4
      %s322 = sadd.s32 %s320, %s321
      %s323 = smul.addr %s322, 4
      %s324 = scalar_lea.vmem %s6, %s323
      %p325 = pneg %p230
      %p326 = pneg %p227
      %p327 = scmp.lt.s32.totalorder %s23, 1
      %s328 = scalar_select %p327, %s23, 1
      %p329 = scmp.lt.s32.totalorder %s24, 3
      %s330 = scalar_select %p329, %s24, 3
      %s331 = smul.addr %s328, 4
      %s332 = sadd.s32 %s330, %s331
      %s333 = smul.addr %s332, 4
      %s334 = scalar_lea.vmem %s7, %s333
      %p335 = scmp.lt.s32.totalorder %s23, 1
      %s336 = scalar_select %p335, %s23, 1
      %s337 = smul.addr %s336, 8
      %s338 = scalar_lea.vmem %s0, %s337
      %p339 = scmp.lt.s32.totalorder %s24, 3
      %s340 = scalar_select %p339, %s24, 3
      %s341 = smul.addr %s340, 4
      %s342 = smul.addr %s341, 4
      %s343 = scalar_lea.vmem %s3, %s342
      %p344 = scmp.lt.s32.totalorder %s24, 3
      %s345 = scalar_select %p344, %s24, 3
      %s346 = scalar_lea.vmem %s4, %s345
      %p347 = scmp.lt.s32.totalorder %s23, 1
      %s348 = scalar_select %p347, %s23, 1
      %p349 = scmp.lt.s32.totalorder %s24, 3
      %s350 = scalar_select %p349, %s24, 3
      %s351 = smul.addr %s348, 4
      %s352 = sadd.s32 %s350, %s351
      %s353 = smul.addr %s352, 4
      %s354 = scalar_lea.vmem %s5, %s353
      %p355 = scmp.lt.s32.totalorder %s23, 1
      %s356 = scalar_select %p355, %s23, 1
      %p357 = scmp.lt.s32.totalorder %s24, 3
      %s358 = scalar_select %p357, %s24, 3
      %s359 = smul.addr %s356, 4
      %s360 = sadd.s32 %s358, %s359
      %s361 = smul.addr %s360, 4
      %s362 = scalar_lea.vmem %s6, %s361
      %p363 = scmp.lt.s32.totalorder %s23, 1
      %s364 = scalar_select %p363, %s23, 1
      %p365 = scmp.lt.s32.totalorder %s24, 3
      %s366 = scalar_select %p365, %s24, 3
      %s367 = smul.addr %s364, 4
      %s368 = sadd.s32 %s366, %s367
      %s369 = smul.addr %s368, 4
      %s370 = scalar_lea.vmem %s7, %s369
      %p372 = scmp.eq.s32.totalorder %s24, 0
      // Predicated region
      $region41: #{gpt_forward.7} parent=39 // pred_check
        %p373 = pneg %p372
      $region42: #{gpt_forward.7} parent=39 // pred_check_branch
        %375 = sbr.rel (%p373) target = $region44
      $region43: #{gpt_forward.7} parent=39 // pred_region
        %v376 = vld [vmem:[%s338] sm:$0xff]
        %v377 = vld [vmem:[%s1] sm:$0x1]
        %v378 = vld [vmem:[%s2] sm:$0x1]
        %vm379 = vcmask 261120
        %v380 = vsel %vm379, %v376, 0.0
        %381 = vadd.xlane.f32.xlu0 %v380
        %v382 = vpop.xlane.xlu0 %381
        %v383 = vrcp.pop 32.0
        %v384 = vmul.f32 32.0, %v383
        %v385 = vsub.f32 1.0, %v384
        %v386 = vmul.f32 %v383, %v385
        %v387 = vadd.f32 %v383, %v386
        %vm388 = vweird.f32 %v383
        %v389 = vsel %vm388, %v383, %v387
        %v390 = vmul.f32 %v382, %v389
        %v391 = vsub.f32 %v376, %v390
        %v392 = vmul.f32 %v391, %v391
        %v393 = vsel %vm379, %v392, 0.0
        %394 = vadd.xlane.f32.xlu0 %v393
        %v395 = vpop.xlane.xlu0 %394
        %v396 = vmul.f32 %v395, %v389
        %v397 = vadd.f32 %v396, 1e-05
        %v398 = vrsqrt.pop %v397
        %v399 = vmul.f32 %v398, %v397
        %v400 = vmul.f32 %v399, %v398
        %v401 = vmul.f32 0.5, %v400
        %v402 = vsub.f32 1.5, %v401
        %v403 = vmul.f32 %v398, %v402
        %vm404 = vweird.f32 %v397
        %vm405 = vweird.f32 %v398
        %vm406 = vmor %vm404, %vm405
        %v407 = vsel %vm406, %v398, %v403
        %v408 = vmul.f32 %v391, %v407
        %v410 = vperm.slane %v377, 0
        %v412 = vmul.f32 %v408, %v410
        %v414 = vperm.slane %v378, 0
        %v416 = vadd.f32 %v412, %v414
        %v417 = vpack.c.bf16 %v416, %v416
        %vm418 = vcmask 257024
        %419 = vst.msk [vmem:[#allocation2] sm:$0xf] %vm418, %v417
      $region44: #{gpt_forward.7} parent=39 // pred_fallthru
        _
      %v420 = vld [vmem:[#allocation2] sm:$0xf]
      %v421 = vld [vmem:[%s343] sm:$0xf]
      %v422 = vld [vmem:[%s343 + $0x4] sm:$0xf]
      %v423 = vld [vmem:[%s343 + $0x8] sm:$0xf]
      %v424 = vld [vmem:[%s343 + $0xc] sm:$0xf]
      %v425 = vld [vmem:[%s346] sm:$0x1]
      %v427 = vperm.slane %v425, 0
      %v433 = vunpack.c.l.b16 %v421
      %v434 = vunpack.c.l.b16 %v422
      %v435 = vunpack.c.l.b16 %v423
      %v436 = vunpack.c.l.b16 %v424
      %v437 = vpack.c.b16 %v434, %v433
      %v438 = vpack.c.b16 %v436, %v435
      %vm441 = vcmask 261120
      %v443 = vsel %vm441, %v420, 0
      %445 = vmatpush.bf16.msra.mxu0 0
      %446 = vmatpush.bf16.msra.mxu0 0
      %447 = vmatpush.bf16.msra.mxu0 0
      %448 = vmatpush.bf16.msra.mxu0 0
      %449 = vmatpush.bf16.msra.mxu0 0
      %450 = vmatpush.bf16.msra.mxu0 0
      %451 = vmatpush.bf16.msra.mxu0 %v438
      %452 = vmatpush.bf16.msra.mxu0 %v437
      %453 = vmatmul.bf16.gmra.mxu0 %v443
      %v454 = vpop.f32.mrf.mxu0
      %v455 = vadd.f32 %v427, %v454
      %v456 = vpop.f32.mrf.mxu0
      %457 = vdwg.mxu0
      %v458 = vmul.f32 %v455, 0.35355338
      %v459 = vpack.c.bf16 %v458, %v458
      %vm460 = vcmask 60416
      %461 = vst.msk [vmem:[%s354] sm:$0xf] %vm460, %v459
      %v462 = vpack.c.bf16 %v455, %v455
      %464 = vrot.lane.b32.xlu0 %v462, 120
      %v465 = vpop.permute.xlu0 %464
      %467 = vst.msk [vmem:[%s362] sm:$0xf] %vm460, %v465
      %468 = vrot.lane.b32.xlu0 %v462, 112
      %v469 = vpop.permute.xlu0 %468
      %471 = vst.msk [vmem:[%s370] sm:$0xf] %vm460, %v469
      %p472 = scmp.lt.s32.totalorder %s23, 1
      %s473 = scalar_select %p472, %s23, 1
      %p474 = scmp.lt.s32.totalorder %s24, 3
      %s475 = scalar_select %p474, %s24, 3
      %s476 = smul.addr %s473, 4
      %s477 = sadd.s32 %s475, %s476
      %s478 = smul.addr %s477, 4
      %s479 = scalar_lea.vmem %s5, %s478
      %p480 = scmp.lt.s32.totalorder %s23, 1
      %s481 = scalar_select %p480, %s23, 1
      %p482 = scmp.lt.s32.totalorder %s24, 3
      %s483 = scalar_select %p482, %s24, 3
      %s484 = smul.addr %s481, 4
      %s485 = sadd.s32 %s483, %s484
      %s486 = smul.addr %s485, 4
      %s487 = scalar_lea.vmem %s6, %s486
      %p488 = scmp.lt.s32.totalorder %s23, 1
      %s489 = scalar_select %p488, %s23, 1
      %p490 = scmp.lt.s32.totalorder %s24, 3
      %s491 = scalar_select %p490, %s24, 3
      %s492 = smul.addr %s489, 4
      %s493 = sadd.s32 %s491, %s492
      %s494 = smul.addr %s493, 4
      %s495 = scalar_lea.vmem %s7, %s494
      // Predicated region
      $region45: #{gpt_forward.7} parent=39 // pred_check
        %p496 = pneg %p171
      $region46: #{gpt_forward.7} parent=39 // pred_check_branch
        %498 = sbr.rel (%p496) target = $region48
      $region47: #{gpt_forward.7} parent=39 // pred_region
        _
      $region48: #{gpt_forward.7} parent=39 // pred_fallthru
        _
      // Predicated region
      $region49: #{gpt_forward.7} parent=39 // pred_check
        %p499 = pneg %p199
      $region50: #{gpt_forward.7} parent=39 // pred_check_branch
        %501 = sbr.rel (%p499) target = $region52
      $region51: #{gpt_forward.7} parent=39 // pred_region
        _
      $region52: #{gpt_forward.7} parent=39 // pred_fallthru
        _
      // Predicated region
      $region53: #{gpt_forward.7} parent=39 // pred_check
        %p502 = pneg %p227
      $region54: #{gpt_forward.7} parent=39 // pred_check_branch
        %504 = sbr.rel (%p502) target = $region56
      $region55: #{gpt_forward.7} parent=39 // pred_region
        _
      $region56: #{gpt_forward.7} parent=39 // pred_fallthru
        _
    $region40: #{gpt_forward.7} parent=5 // pred_fallthru
      _
    %p505 = scmp.le.s32.totalorder 2, %s14
    // Predicated region
    $region57: #{gpt_forward.7} parent=5 // pred_check
      %p506 = pneg %p505
    $region58: #{gpt_forward.7} parent=5 // pred_check_branch
      %508 = sbr.rel (%p506) target = $region60
    $region59: #{gpt_forward.7} parent=5 // pred_region
      %s509 = ssub.s32 %s14, 2
      // Predicated region
      $region61: #{gpt_forward.7} parent=59 // pred_check
        %p510 = pneg %p177
      $region62: #{gpt_forward.7} parent=59 // pred_check_branch
        %512 = sbr.rel (%p510) target = $region64
      $region63: #{gpt_forward.7} parent=59 // pred_region
        %p513 = scmp.lt.s32.totalorder %s25, 1
        %s514 = scalar_select %p513, %s25, 1
        %p515 = scmp.lt.s32.totalorder %s26, 3
        %s516 = scalar_select %p515, %s26, 3
        %s517 = smul.addr %s514, 4
        %s518 = sadd.s32 %s516, %s517
        %s519 = smul.addr %s518, 4
        %s520 = scalar_lea.vmem %s5, %s519
      $region64: #{gpt_forward.7} parent=59 // pred_fallthru
        _
      // Predicated region
      $region65: #{gpt_forward.7} parent=59 // pred_check
        %p521 = pneg %p205
      $region66: #{gpt_forward.7} parent=59 // pred_check_branch
        %523 = sbr.rel (%p521) target = $region68
      $region67: #{gpt_forward.7} parent=59 // pred_region
        %p524 = scmp.lt.s32.totalorder %s25, 1
        %s525 = scalar_select %p524, %s25, 1
        %p526 = scmp.lt.s32.totalorder %s26, 3
        %s527 = scalar_select %p526, %s26, 3
        %s528 = smul.addr %s525, 4
        %s529 = sadd.s32 %s527, %s528
        %s530 = smul.addr %s529, 4
        %s531 = scalar_lea.vmem %s6, %s530
      $region68: #{gpt_forward.7} parent=59 // pred_fallthru
        _
      // Predicated region
      $region69: #{gpt_forward.7} parent=59 // pred_check
        %p532 = pneg %p233
      $region70: #{gpt_forward.7} parent=59 // pred_check_branch
        %534 = sbr.rel (%p532) target = $region72
      $region71: #{gpt_forward.7} parent=59 // pred_region
        %p535 = scmp.lt.s32.totalorder %s25, 1
        %s536 = scalar_select %p535, %s25, 1
        %p537 = scmp.lt.s32.totalorder %s26, 3
        %s538 = scalar_select %p537, %s26, 3
        %s539 = smul.addr %s536, 4
        %s540 = sadd.s32 %s538, %s539
        %s541 = smul.addr %s540, 4
        %s542 = scalar_lea.vmem %s7, %s541
      $region72: #{gpt_forward.7} parent=59 // pred_fallthru
        _
    $region60: #{gpt_forward.7} parent=5 // pred_fallthru
      _
  $region6: #{gpt_forward.7} parent=0 // loop_footer
    %s18 = sadd.s32 1, %s14
  $region7: #{gpt_forward.7} parent=0 // loop_footer_branch
    %13 = sbr.rel target = $region3
  $region8: #{gpt_forward.7} parent=0 // loop_exit
    _

// kernel: gpt_forward.13
$region0: #{gpt_forward.13}
  #allocation0 [shape = 'u32[]', space=smem, size = 0x4, offset = 0x4, fixed_abs, tag = 'smem constant byte address 0x4 - core index']
  #allocation1 [shape = 'u32[72,128]{1,0:T(1,128)}', space=vmem, size = 0x9000, scoped, tag = 'internal scratch']
  %s0 = inlined_call_operand.vmem [shape: bf16[2,32], index: 0, kind: input, shape index: {}]
  %s1 = inlined_call_operand.vmem [shape: bf16[32,64], index: 1, kind: input, shape index: {}]
  %s2 = inlined_call_operand.hbm [shape: f32[2,64], index: 2, kind: output, shape index: {}]
  %s3 = sld [smem:[#allocation0]]
  $region18: #{gpt_forward.13} parent=0
    _
  %s5 = ssub.s32 1, %s3
  %s6 = scalar_select 0, %s5, %s3
  $region1: #{gpt_forward.13} parent=0
    #allocation2 [shape = 'u8[1024]{0}', space=vmem, size = 0x400, scoped, tag = 'output window, operand 0, single buffered']
    #allocation3 [shape = 's32[1]{0}', space=sflag, size = 0x4, scoped, tag = 'scoped memory for gpt_forward.13']
    %7 = vsyncpa [#allocation3], 0
    // Predicated region
    $region2: #{gpt_forward.13} parent=1 // pred_check
      _
    $region3: #{gpt_forward.13} parent=1 // pred_check_branch
      %9 = sbr.rel (0) target = $region5
    $region4: #{gpt_forward.13} parent=1 // pred_region
      _
    $region5: #{gpt_forward.13} parent=1 // pred_fallthru
      _
    // Predicated region
    $region6: #{gpt_forward.13} parent=1 // pred_check
      _
    $region7: #{gpt_forward.13} parent=1 // pred_check_branch
      %11 = sbr.rel (0) target = $region9
    $region8: #{gpt_forward.13} parent=1 // pred_region
      _
    $region9: #{gpt_forward.13} parent=1 // pred_fallthru
      _
    %v13 = vld [vmem:[%s0] sm:$0x1]
    %v14 = vld [vmem:[%s1] sm:$0xf]
    %v15 = vld [vmem:[%s1 + $0x4] sm:$0xf]
    %v16 = vld [vmem:[%s1 + $0x8] sm:$0xf]
    %v17 = vld [vmem:[%s1 + $0xc] sm:$0xf]
    %v22 = vunpack.c.l.b16 %v14
    %v23 = vunpack.c.l.b16 %v15
    %v24 = vunpack.c.l.b16 %v16
    %v25 = vunpack.c.l.b16 %v17
    %v26 = vpack.c.b16 %v23, %v22
    %v27 = vpack.c.b16 %v25, %v24
    %vm30 = vcmask 261120
    %v32 = vsel %vm30, %v13, 0
    %34 = vmatpush.bf16.msra.mxu0 0
    %35 = vmatpush.bf16.msra.mxu0 0
    %36 = vmatpush.bf16.msra.mxu0 0
    %37 = vmatpush.bf16.msra.mxu0 0
    %38 = vmatpush.bf16.msra.mxu0 0
    %39 = vmatpush.bf16.msra.mxu0 0
    %40 = vmatpush.bf16.msra.mxu0 %v27
    %41 = vmatpush.bf16.msra.mxu0 %v26
    %42 = vmatmul.bf16.gmra.mxu0 %v32
    %v43 = vpop.f32.mrf.mxu0
    %v44 = vadd.f32 0.0, %v43
    %v45 = vpop.f32.mrf.mxu0
    %46 = vdwg.mxu0
    %vm47 = vcmask 517120
    %48 = vst.msk [vmem:[#allocation2] sm:$0x3] %vm47, %v44
    // Predicated region
    $region10: #{gpt_forward.13} parent=1 // pred_check
      _
    $region11: #{gpt_forward.13} parent=1 // pred_check_branch
      %50 = sbr.rel (0) target = $region13
    $region12: #{gpt_forward.13} parent=1 // pred_region
      %52 = vsyncadd [#allocation3], 0
      %s54 = sshll.u32 [#allocation2], 4
      %s55 = int_to_ptr.vmem [resolvable:$true] %s54
      %s56 = sshll.u32 %s2, 4
      %s57 = int_to_ptr.hbm [resolvable:$true] %s56
      %59 = dma.vmem_to_hbm [thread:$0]  %s55, 32, %s57, [#allocation3]
    $region13: #{gpt_forward.13} parent=1 // pred_fallthru
      _
    // Predicated region
    $region14: #{gpt_forward.13} parent=1 // pred_check
      _
    $region15: #{gpt_forward.13} parent=1 // pred_check_branch
      %61 = sbr.rel (0) target = $region17
    $region16: #{gpt_forward.13} parent=1 // pred_region
      %63 = dma.done [#allocation3], 32
    $region17: #{gpt_forward.13} parent=1 // pred_fallthru
      _
    %64 = vsyncpa [#allocation3], 1

// kernel: gpt_forward.8
$region0: #{gpt_forward.8}
  #allocation0 [shape = 'u32[]', space=smem, size = 0x4, offset = 0x4, fixed_abs, tag = 'smem constant byte address 0x4 - core index']
  #allocation1 [shape = 'u32[72,128]{1,0:T(1,128)}', space=vmem, size = 0x9000, scoped, tag = 'internal scratch']
  #allocation2 [shape = 'f32[8,32]{1,0:T(8,128)}', space=vmem, size = 0x1000, scoped, tag = 'scratch operand']
  %s0 = inlined_call_operand.vmem [shape: f32[2,8,32], index: 0, kind: input, shape index: {}]
  %s1 = inlined_call_operand.vmem [shape: bf16[2,4,8,8], index: 1, kind: input, shape index: {}]
  %s2 = inlined_call_operand.vmem [shape: bf16[2,4,8,8], index: 2, kind: input, shape index: {}]
  %s3 = inlined_call_operand.vmem [shape: bf16[2,4,8,8], index: 3, kind: input, shape index: {}]
  %s4 = inlined_call_operand.vmem [shape: bf16[4,8,32], index: 4, kind: input, shape index: {}]
  %s5 = inlined_call_operand.vmem [shape: f32[1,32], index: 5, kind: input, shape index: {}]
  %s6 = inlined_call_operand.vmem [shape: f32[2,8,32], index: 6, kind: output, shape index: {}]
  %s7 = sld [smem:[#allocation0]]
  $region65: #{gpt_forward.8} parent=0
    _
  %s9 = ssub.s32 1, %s7
  %s10 = scalar_select 0, %s9, %s7
  loop: start=0, step=1, limit=10
  $region2: #{gpt_forward.8} parent=0 // loop_pre_header
    _
  $region3: #{gpt_forward.8} parent=0 // loop_header
    %s12 = sphi 0, %s16
    %p13 = scmp.ge.s32.totalorder %s12, 10
    %s19 = sphi 0, %s38
    %s20 = sphi 0, %s34
    %s21 = sphi 0, %s30
    %s22 = sphi 0, %s19
    %s23 = sphi 0, %s20
    %s24 = sphi 0, %s21
    %s25 = sphi 0, %s22
    %s26 = sphi 0, %s23
    %s27 = sphi 0, %s24
    %s43 = sphi 0, %s45
    %s46 = sphi 0, %s43
    %s47 = sphi 0, %s46
    %s63 = sphi 0, %s47
    %s73 = sphi 0, %s75
    %s76 = sphi 0, %s73
    %s77 = sphi 0, %s76
    %s93 = sphi 0, %s77
    %s101 = sphi 0, %s103
    %s104 = sphi 0, %s101
    %s105 = sphi 0, %s104
    %s121 = sphi 0, %s105
    %s129 = sphi 0, %s131
    %s132 = sphi 0, %s129
    %s133 = sphi 0, %s132
    %s149 = sphi 0, %s133
    %s155 = sphi 0, %s157
    %s158 = sphi 0, %s155
    %s159 = sphi 0, %s158
    %s175 = sphi 0, %s159
    %s179 = sphi 0, %s179
    %s181 = sphi 0, %s179
    %s182 = sphi 0, %s181
    %s196 = sphi 0, %s182
    %s204 = sphi 0, %s206
    %s207 = sphi 0, %s204
    %s208 = sphi 0, %s207
    %s224 = sphi 0, %s208
  $region4: #{gpt_forward.8} parent=0 // loop_header_branch
    %15 = sbr.rel (%p13) target = $region8
  $region5: #{gpt_forward.8} parent=0 // loop_body
    %s17 = ssub.s32 %s12, 1
    %s18 = ssub.s32 %s12, 2
    %s28 = sadd.s32 1, %s21
    %p29 = scmp.ge.s32.totalorder %s28, 4
    %s30 = scalar_select %p29, 0, %s28
    %s31 = sadd.s32 1, %s20
    %s32 = scalar_select %p29, %s31, %s20
    %p33 = scmp.ge.s32.totalorder %s32, 1
    %s34 = scalar_select %p33, 0, %s32
    %s35 = sadd.s32 1, %s19
    %s36 = scalar_select %p33, %s35, %s19
    %p37 = scmp.ge.s32.totalorder %s36, 2
    %s38 = scalar_select %p37, 0, %s36
    %s39 = ssub.s32 %s19, %s38
    %s40 = ssub.s32 %s20, %s34
    %s41 = sor.u32 %s39, %s40
    %p42 = scmp.eq.s32.totalorder %s41, 0
    %s44 = sadd.s32 %s43, 1
    %s45 = scalar_select %p42, %s43, %s44
    %p48 = pneg %p42
    %p49 = scmp.eq.s32.totalorder %s12, 7
    %p50 = por %p48, %p49
    %p51 = scmp.ne.s32.totalorder %s43, %s46
    %p52 = scmp.eq.s32.totalorder %s12, 0
    %p53 = por %p51, %p52
    %p54 = scmp.ne.s32.totalorder %s43, %s46
    %p55 = scmp.eq.s32.totalorder %s17, 7
    %p56 = por %p54, %p55
    %p57 = scmp.ne.s32.totalorder %s46, %s47
    %p58 = scmp.eq.s32.totalorder %s17, 0
    %p59 = por %p57, %p58
    %p60 = scmp.ne.s32.totalorder %s46, %s47
    %p61 = scmp.eq.s32.totalorder %s18, 7
    %p62 = por %p60, %p61
    %p64 = scmp.ne.s32.totalorder %s47, %s63
    %p65 = scmp.eq.s32.totalorder %s18, 0
    %p66 = por %p64, %p65
    %s67 = ssub.s32 %s19, %s38
    %s68 = ssub.s32 %s21, %s30
    %s69 = sor.u32 %s67, %s68
    %s70 = ssub.s32 %s20, %s34
    %s71 = sor.u32 %s69, %s70
    %p72 = scmp.eq.s32.totalorder %s71, 0
    %s74 = sadd.s32 %s73, 1
    %s75 = scalar_select %p72, %s73, %s74
    %p78 = pneg %p72
    %p79 = scmp.eq.s32.totalorder %s12, 7
    %p80 = por %p78, %p79
    %p81 = scmp.ne.s32.totalorder %s73, %s76
    %p82 = scmp.eq.s32.totalorder %s12, 0
    %p83 = por %p81, %p82
    %p84 = scmp.ne.s32.totalorder %s73, %s76
    %p85 = scmp.eq.s32.totalorder %s17, 7
    %p86 = por %p84, %p85
    %p87 = scmp.ne.s32.totalorder %s76, %s77
    %p88 = scmp.eq.s32.totalorder %s17, 0
    %p89 = por %p87, %p88
    %p90 = scmp.ne.s32.totalorder %s76, %s77
    %p91 = scmp.eq.s32.totalorder %s18, 7
    %p92 = por %p90, %p91
    %p94 = scmp.ne.s32.totalorder %s77, %s93
    %p95 = scmp.eq.s32.totalorder %s18, 0
    %p96 = por %p94, %p95
    %s97 = ssub.s32 %s19, %s38
    %s98 = ssub.s32 %s21, %s30
    %s99 = sor.u32 %s97, %s98
    %p100 = scmp.eq.s32.totalorder %s99, 0
    %s102 = sadd.s32 %s101, 1
    %s103 = scalar_select %p100, %s101, %s102
    %p106 = pneg %p100
    %p107 = scmp.eq.s32.totalorder %s12, 7
    %p108 = por %p106, %p107
    %p109 = scmp.ne.s32.totalorder %s101, %s104
    %p110 = scmp.eq.s32.totalorder %s12, 0
    %p111 = por %p109, %p110
    %p112 = scmp.ne.s32.totalorder %s101, %s104
    %p113 = scmp.eq.s32.totalorder %s17, 7
    %p114 = por %p112, %p113
    %p115 = scmp.ne.s32.totalorder %s104, %s105
    %p116 = scmp.eq.s32.totalorder %s17, 0
    %p117 = por %p115, %p116
    %p118 = scmp.ne.s32.totalorder %s104, %s105
    %p119 = scmp.eq.s32.totalorder %s18, 7
    %p120 = por %p118, %p119
    %p122 = scmp.ne.s32.totalorder %s105, %s121
    %p123 = scmp.eq.s32.totalorder %s18, 0
    %p124 = por %p122, %p123
    %s125 = ssub.s32 %s19, %s38
    %s126 = ssub.s32 %s21, %s30
    %s127 = sor.u32 %s125, %s126
    %p128 = scmp.eq.s32.totalorder %s127, 0
    %s130 = sadd.s32 %s129, 1
    %s131 = scalar_select %p128, %s129, %s130
    %p134 = pneg %p128
    %p135 = scmp.eq.s32.totalorder %s12, 7
    %p136 = por %p134, %p135
    %p137 = scmp.ne.s32.totalorder %s129, %s132
    %p138 = scmp.eq.s32.totalorder %s12, 0
    %p139 = por %p137, %p138
    %p140 = scmp.ne.s32.totalorder %s129, %s132
    %p141 = scmp.eq.s32.totalorder %s17, 7
    %p142 = por %p140, %p141
    %p143 = scmp.ne.s32.totalorder %s132, %s133
    %p144 = scmp.eq.s32.totalorder %s17, 0
    %p145 = por %p143, %p144
    %p146 = scmp.ne.s32.totalorder %s132, %s133
    %p147 = scmp.eq.s32.totalorder %s18, 7
    %p148 = por %p146, %p147
    %p150 = scmp.ne.s32.totalorder %s133, %s149
    %p151 = scmp.eq.s32.totalorder %s18, 0
    %p152 = por %p150, %p151
    %s153 = ssub.s32 %s21, %s30
    %p154 = scmp.eq.s32.totalorder %s153, 0
    %s156 = sadd.s32 %s155, 1
    %s157 = scalar_select %p154, %s155, %s156
    %p160 = pneg %p154
    %p161 = scmp.eq.s32.totalorder %s12, 7
    %p162 = por %p160, %p161
    %p163 = scmp.ne.s32.totalorder %s155, %s158
    %p164 = scmp.eq.s32.totalorder %s12, 0
    %p165 = por %p163, %p164
    %p166 = scmp.ne.s32.totalorder %s155, %s158
    %p167 = scmp.eq.s32.totalorder %s17, 7
    %p168 = por %p166, %p167
    %p169 = scmp.ne.s32.totalorder %s158, %s159
    %p170 = scmp.eq.s32.totalorder %s17, 0
    %p171 = por %p169, %p170
    %p172 = scmp.ne.s32.totalorder %s158, %s159
    %p173 = scmp.eq.s32.totalorder %s18, 7
    %p174 = por %p172, %p173
    %p176 = scmp.ne.s32.totalorder %s159, %s175
    %p177 = scmp.eq.s32.totalorder %s18, 0
    %p178 = por %p176, %p177
    %s180 = sadd.s32 %s179, 1
    %p183 = scmp.eq.s32.totalorder %s12, 7
    %p184 = scmp.ne.s32.totalorder %s179, %s181
    %p185 = scmp.eq.s32.totalorder %s12, 0
    %p186 = por %p184, %p185
    %p187 = scmp.ne.s32.totalorder %s179, %s181
    %p188 = scmp.eq.s32.totalorder %s17, 7
    %p189 = por %p187, %p188
    %p190 = scmp.ne.s32.totalorder %s181, %s182
    %p191 = scmp.eq.s32.totalorder %s17, 0
    %p192 = por %p190, %p191
    %p193 = scmp.ne.s32.totalorder %s181, %s182
    %p194 = scmp.eq.s32.totalorder %s18, 7
    %p195 = por %p193, %p194
    %p197 = scmp.ne.s32.totalorder %s182, %s196
    %p198 = scmp.eq.s32.totalorder %s18, 0
    %p199 = por %p197, %p198
    %s200 = ssub.s32 %s19, %s38
    %s201 = ssub.s32 %s20, %s34
    %s202 = sor.u32 %s200, %s201
    %p203 = scmp.eq.s32.totalorder %s202, 0
    %s205 = sadd.s32 %s204, 1
    %s206 = scalar_select %p203, %s204, %s205
    %p209 = pneg %p203
    %p210 = scmp.eq.s32.totalorder %s12, 7
    %p211 = por %p209, %p210
    %p212 = scmp.ne.s32.totalorder %s204, %s207
    %p213 = scmp.eq.s32.totalorder %s12, 0
    %p214 = por %p212, %p213
    %p215 = scmp.ne.s32.totalorder %s204, %s207
    %p216 = scmp.eq.s32.totalorder %s17, 7
    %p217 = por %p215, %p216
    %p218 = scmp.ne.s32.totalorder %s207, %s208
    %p219 = scmp.eq.s32.totalorder %s17, 0
    %p220 = por %p218, %p219
    %p221 = scmp.ne.s32.totalorder %s207, %s208
    %p222 = scmp.eq.s32.totalorder %s18, 7
    %p223 = por %p221, %p222
    %p225 = scmp.ne.s32.totalorder %s208, %s224
    %p226 = scmp.eq.s32.totalorder %s18, 0
    %p227 = por %p225, %p226
    %p228 = scmp.le.s32.totalorder 1, %s12
    %p229 = scmp.lt.s32.totalorder %s12, 9
    %p230 = pnand %p228, %p229
    %p231 = pneg %p230
    // Predicated region
    $region9: #{gpt_forward.8} parent=5 // pred_check
      _
    $region10: #{gpt_forward.8} parent=5 // pred_check_branch
      %233 = sbr.rel (%p230) target = $region12
    $region11: #{gpt_forward.8} parent=5 // pred_region
      %s234 = ssub.s32 %s12, 1
      // Predicated region
      $region13: #{gpt_forward.8} parent=11 // pred_check
        %p235 = pneg %p192
      $region14: #{gpt_forward.8} parent=11 // pred_check_branch
        %237 = sbr.rel (%p235) target = $region16
      $region15: #{gpt_forward.8} parent=11 // pred_region
        _
      $region16: #{gpt_forward.8} parent=11 // pred_fallthru
        _
    $region12: #{gpt_forward.8} parent=5 // pred_fallthru
      _
    %p238 = scmp.lt.s32.totalorder %s12, 8
    // Predicated region
    $region17: #{gpt_forward.8} parent=5 // pred_check
      %p239 = pneg %p238
    $region18: #{gpt_forward.8} parent=5 // pred_check_branch
      %241 = sbr.rel (%p239) target = $region20
    $region19: #{gpt_forward.8} parent=5 // pred_region
      // Predicated region
      $region21: #{gpt_forward.8} parent=19 // pred_check
        %p242 = pneg %p53
      $region22: #{gpt_forward.8} parent=19 // pred_check_branch
        %244 = sbr.rel (%p242) target = $region24
      $region23: #{gpt_forward.8} parent=19 // pred_region
        %p245 = scmp.lt.s32.totalorder %s19, 1
        %s246 = scalar_select %p245, %s19, 1
        %p247 = scmp.lt.s32.totalorder %s20, 0
        %s248 = scalar_select %p247, %s20, 0
        %s249 = sadd.s32 %s248, %s246
        %s250 = smul.addr %s249, 8
        %s251 = scalar_lea.vmem %s0, %s250
      $region24: #{gpt_forward.8} parent=19 // pred_fallthru
        _
      // Predicated region
      $region25: #{gpt_forward.8} parent=19 // pred_check
        %p252 = pneg %p83
      $region26: #{gpt_forward.8} parent=19 // pred_check_branch
        %254 = sbr.rel (%p252) target = $region28
      $region27: #{gpt_forward.8} parent=19 // pred_region
        %p255 = scmp.lt.s32.totalorder %s19, 1
        %s256 = scalar_select %p255, %s19, 1
        %p257 = scmp.lt.s32.totalorder %s21, 3
        %s258 = scalar_select %p257, %s21, 3
        %p259 = scmp.lt.s32.totalorder %s20, 0
        %s260 = scalar_select %p259, %s20, 0
        %s261 = sadd.s32 %s260, %s258
        %s262 = smul.addr %s256, 4
        %s263 = sadd.s32 %s261, %s262
        %s264 = smul.addr %s263, 4
        %s265 = scalar_lea.vmem %s1, %s264
      $region28: #{gpt_forward.8} parent=19 // pred_fallthru
        _
      // Predicated region
      $region29: #{gpt_forward.8} parent=19 // pred_check
        %p266 = pneg %p111
      $region30: #{gpt_forward.8} parent=19 // pred_check_branch
        %268 = sbr.rel (%p266) target = $region32
      $region31: #{gpt_forward.8} parent=19 // pred_region
        %p269 = scmp.lt.s32.totalorder %s19, 1
        %s270 = scalar_select %p269, %s19, 1
        %p271 = scmp.lt.s32.totalorder %s21, 3
        %s272 = scalar_select %p271, %s21, 3
        %s273 = smul.addr %s270, 4
        %s274 = sadd.s32 %s272, %s273
        %s275 = smul.addr %s274, 4
        %s276 = scalar_lea.vmem %s2, %s275
      $region32: #{gpt_forward.8} parent=19 // pred_fallthru
        _
      // Predicated region
      $region33: #{gpt_forward.8} parent=19 // pred_check
        %p277 = pneg %p139
      $region34: #{gpt_forward.8} parent=19 // pred_check_branch
        %279 = sbr.rel (%p277) target = $region36
      $region35: #{gpt_forward.8} parent=19 // pred_region
        %p280 = scmp.lt.s32.totalorder %s19, 1
        %s281 = scalar_select %p280, %s19, 1
        %p282 = scmp.lt.s32.totalorder %s21, 3
        %s283 = scalar_select %p282, %s21, 3
        %s284 = smul.addr %s281, 4
        %s285 = sadd.s32 %s283, %s284
        %s286 = smul.addr %s285, 4
        %s287 = scalar_lea.vmem %s3, %s286
      $region36: #{gpt_forward.8} parent=19 // pred_fallthru
        _
      // Predicated region
      $region37: #{gpt_forward.8} parent=19 // pred_check
        %p288 = pneg %p165
      $region38: #{gpt_forward.8} parent=19 // pred_check_branch
        %290 = sbr.rel (%p288) target = $region40
      $region39: #{gpt_forward.8} parent=19 // pred_region
        %p291 = scmp.lt.s32.totalorder %s21, 3
        %s292 = scalar_select %p291, %s21, 3
        %s293 = smul.addr %s292, 4
        %s294 = scalar_lea.vmem %s4, %s293
      $region40: #{gpt_forward.8} parent=19 // pred_fallthru
        _
    $region20: #{gpt_forward.8} parent=5 // pred_fallthru
      _
    %p295 = scmp.le.s32.totalorder 1, %s12
    %p296 = scmp.lt.s32.totalorder %s12, 9
    %p297 = pnand %p295, %p296
    %p298 = pneg %p297
    // Predicated region
    $region41: #{gpt_forward.8} parent=5 // pred_check
      _
    $region42: #{gpt_forward.8} parent=5 // pred_check_branch
      %300 = sbr.rel (%p297) target = $region44
    $region43: #{gpt_forward.8} parent=5 // pred_region
      %s301 = ssub.s32 %s12, 1
      %p302 = scmp.lt.s32.totalorder %s22, 1
      %s303 = scalar_select %p302, %s22, 1
      %p304 = scmp.lt.s32.totalorder %s23, 0
      %s305 = scalar_select %p304, %s23, 0
      %s306 = sadd.s32 %s305, %s303
      %s307 = smul.addr %s306, 8
      %s308 = scalar_lea.vmem %s0, %s307
      %p309 = pneg %p59
      %p310 = pneg %p56
      %p311 = scmp.lt.s32.totalorder %s22, 1
      %s312 = scalar_select %p311, %s22, 1
      %p313 = scmp.lt.s32.totalorder %s24, 3
      %s314 = scalar_select %p313, %s24, 3
      %p315 = scmp.lt.s32.totalorder %s23, 0
      %s316 = scalar_select %p315, %s23, 0
      %s317 = sadd.s32 %s316, %s314
      %s318 = smul.addr %s312, 4
      %s319 = sadd.s32 %s317, %s318
      %s320 = smul.addr %s319, 4
      %s321 = scalar_lea.vmem %s1, %s320
      %p322 = pneg %p89
      %p323 = pneg %p86
      %p324 = scmp.lt.s32.totalorder %s22, 1
      %s325 = scalar_select %p324, %s22, 1
      %p326 = scmp.lt.s32.totalorder %s24, 3
      %s327 = scalar_select %p326, %s24, 3
      %s328 = smul.addr %s325, 4
      %s329 = sadd.s32 %s327, %s328
      %s330 = smul.addr %s329, 4
      %s331 = scalar_lea.vmem %s2, %s330
      %p332 = pneg %p117
      %p333 = pneg %p114
      %p334 = scmp.lt.s32.totalorder %s22, 1
      %s335 = scalar_select %p334, %s22, 1
      %p336 = scmp.lt.s32.totalorder %s24, 3
      %s337 = scalar_select %p336, %s24, 3
      %s338 = smul.addr %s335, 4
      %s339 = sadd.s32 %s337, %s338
      %s340 = smul.addr %s339, 4
      %s341 = scalar_lea.vmem %s3, %s340
      %p342 = pneg %p145
      %p343 = pneg %p142
      %p344 = scmp.lt.s32.totalorder %s24, 3
      %s345 = scalar_select %p344, %s24, 3
      %s346 = smul.addr %s345, 4
      %s347 = scalar_lea.vmem %s4, %s346
      %p348 = pneg %p171
      %p349 = pneg %p168
      %p350 = pneg %p192
      %p351 = pneg %p189
      %p352 = pneg %p220
      %p353 = pneg %p217
      %p354 = scmp.lt.s32.totalorder %s22, 1
      %s355 = scalar_select %p354, %s22, 1
      %p356 = scmp.lt.s32.totalorder %s23, 0
      %s357 = scalar_select %p356, %s23, 0
      %s358 = sadd.s32 %s357, %s355
      %s359 = smul.addr %s358, 8
      %s360 = scalar_lea.vmem %s6, %s359
      %p361 = scmp.lt.s32.totalorder %s22, 1
      %s362 = scalar_select %p361, %s22, 1
      %p363 = scmp.lt.s32.totalorder %s23, 0
      %s364 = scalar_select %p363, %s23, 0
      %s365 = sadd.s32 %s364, %s362
      %s366 = smul.addr %s365, 8
      %s367 = scalar_lea.vmem %s0, %s366
      %p368 = scmp.lt.s32.totalorder %s22, 1
      %s369 = scalar_select %p368, %s22, 1
      %p370 = scmp.lt.s32.totalorder %s24, 3
      %s371 = scalar_select %p370, %s24, 3
      %p372 = scmp.lt.s32.totalorder %s23, 0
      %s373 = scalar_select %p372, %s23, 0
      %s374 = sadd.s32 %s373, %s371
      %s375 = smul.addr %s369, 4
      %s376 = sadd.s32 %s374, %s375
      %s377 = smul.addr %s376, 4
      %s378 = scalar_lea.vmem %s1, %s377
      %p379 = scmp.lt.s32.totalorder %s22, 1
      %s380 = scalar_select %p379, %s22, 1
      %p381 = scmp.lt.s32.totalorder %s24, 3
      %s382 = scalar_select %p381, %s24, 3
      %s383 = smul.addr %s380, 4
      %s384 = sadd.s32 %s382, %s383
      %s385 = smul.addr %s384, 4
      %s386 = scalar_lea.vmem %s2, %s385
      %p387 = scmp.lt.s32.totalorder %s22, 1
      %s388 = scalar_select %p387, %s22, 1
      %p389 = scmp.lt.s32.totalorder %s24, 3
      %s390 = scalar_select %p389, %s24, 3
      %s391 = smul.addr %s388, 4
      %s392 = sadd.s32 %s390, %s391
      %s393 = smul.addr %s392, 4
      %s394 = scalar_lea.vmem %s3, %s393
      %p395 = scmp.lt.s32.totalorder %s24, 3
      %s396 = scalar_select %p395, %s24, 3
      %s397 = smul.addr %s396, 4
      %s398 = scalar_lea.vmem %s4, %s397
      %p399 = scmp.lt.s32.totalorder %s22, 1
      %s400 = scalar_select %p399, %s22, 1
      %p401 = scmp.lt.s32.totalorder %s23, 0
      %s402 = scalar_select %p401, %s23, 0
      %s403 = sadd.s32 %s402, %s400
      %s404 = smul.addr %s403, 8
      %s405 = scalar_lea.vmem %s6, %s404
      %p407 = scmp.eq.s32.totalorder %s24, 0
      // Predicated region
      $region45: #{gpt_forward.8} parent=43 // pred_check
        %p408 = pneg %p407
      $region46: #{gpt_forward.8} parent=43 // pred_check_branch
        %410 = sbr.rel (%p408) target = $region48
      $region47: #{gpt_forward.8} parent=43 // pred_region
        %vm411 = vcmask 261120
        %412 = vst.msk [vmem:[#allocation2] sm:$0xff] %vm411, 0.0
      $region48: #{gpt_forward.8} parent=43 // pred_fallthru
        _
      %v413 = vld [vmem:[%s378] sm:$0xf]
      %v414 = vld [vmem:[%s386] sm:$0xf]
      %v415 = vld [vmem:[%s394] sm:$0xf]
      %vm416 = vcmask 64512
      %v418 = vsel %vm416, %v413, 0
      %v421 = vsel %vm416, %v414, 0
      %423 = vmatpush.bf16.xpose.msra.mxu0 0
      %424 = vmatpush.bf16.xpose.msra.mxu0 0
      %425 = vmatpush.bf16.xpose.msra.mxu0 0
      %426 = vmatpush.bf16.xpose.msra.mxu0 0
      %427 = vmatpush.bf16.xpose.msra.mxu0 0
      %428 = vmatpush.bf16.xpose.msra.mxu0 0
      %429 = vmatpush.bf16.xpose.msra.mxu0 0
      %430 = vmatpush.bf16.xpose.msra.mxu0 %v421
      %431 = vmatmul.bf16.gmra.mxu0 %v418
      %v432 = vpop.f32.mrf.mxu0
      %v433 = vadd.f32 0.0, %v432
      %v434 = vpop.f32.mrf.mxu0
      %435 = vdwg.mxu0
      %s436 = smul.u32 %s23, 8
      %v437 = vlaneseq
      %v438 = vshrl.u32 %v437, 7
      %v439 = vstv %s436
      %v440 = vadd.s32 %v439, %v438
      %v441 = vlaneseq
      %v442 = vand.u32 %v441, 127
      %vm443 = vcmp.ge.s32.totalorder %v440, %v442
      %v444 = vsel %vm443, %v433, -1e+30
      %v445 = vsel %vm416, %v444, -inf
      %446 = vmax.xlane.f32.xlu0 %v445
      %v447 = vpop.xlane.xlu0 %446
      %v448 = vsub.f32 %v444, %v447
      %v449 = vmul.f32 %v448, 1.442695
      %v450 = vpow.pop %v449
      %v451 = vsel %vm416, %v450, 0.0
      %452 = vadd.xlane.f32.xlu0 %v451
      %v453 = vpop.xlane.xlu0 %452
      %v454 = vrcp.pop %v453
      %v455 = vmul.f32 %v450, %v454
      %v456 = vpack.c.bf16 %v455, %v455
      %v458 = vsel %vm416, %v456, 0
      %vm460 = vcmask 1043456
      %v462 = vsel %vm460, %v415, 0
      %464 = vmatpush.bf16.msra.mxu0 0
      %465 = vmatpush.bf16.msra.mxu0 0
      %466 = vmatpush.bf16.msra.mxu0 0
      %467 = vmatpush.bf16.msra.mxu0 0
      %468 = vmatpush.bf16.msra.mxu0 0
      %469 = vmatpush.bf16.msra.mxu0 0
      %470 = vmatpush.bf16.msra.mxu0 0
      %471 = vmatpush.bf16.msra.mxu0 %v462
      %472 = vmatmul.bf16.gmra.mxu0 %v458
      %v473 = vpop.f32.mrf.mxu0
      %v474 = vadd.f32 0.0, %v473
      %v475 = vpop.f32.mrf.mxu0
      %476 = vdwg.mxu0
      %v477 = vld [vmem:[#allocation2] sm:$0xff]
      %v478 = vpack.c.bf16 %v474, %v474
      %v479 = vld [vmem:[%s398] sm:$0xf]
      %v481 = vsel %vm416, %v478, 0
      %v484 = vsel %vm460, %v479, 0
      %486 = vmatpush.bf16.msra.mxu0 0
      %487 = vmatpush.bf16.msra.mxu0 0
      %488 = vmatpush.bf16.msra.mxu0 0
      %489 = vmatpush.bf16.msra.mxu0 0
      %490 = vmatpush.bf16.msra.mxu0 0
      %491 = vmatpush.bf16.msra.mxu0 0
      %492 = vmatpush.bf16.msra.mxu0 0
      %493 = vmatpush.bf16.msra.mxu0 %v484
      %494 = vmatmul.bf16.gmra.mxu0 %v481
      %v495 = vpop.f32.mrf.mxu0
      %v496 = vadd.f32 0.0, %v495
      %v497 = vpop.f32.mrf.mxu0
      %498 = vdwg.mxu0
      %v499 = vadd.f32 %v477, %v496
      %vm500 = vcmask 261120
      %501 = vst.msk [vmem:[#allocation2] sm:$0xff] %vm500, %v499
      %p502 = scmp.eq.s32.totalorder %s24, 3
      // Predicated region
      $region49: #{gpt_forward.8} parent=43 // pred_check
        %p503 = pneg %p502
      $region50: #{gpt_forward.8} parent=43 // pred_check_branch
        %505 = sbr.rel (%p503) target = $region52
      $region51: #{gpt_forward.8} parent=43 // pred_region
        %v506 = vld [vmem:[%s367] sm:$0xff]
        %v507 = vld [vmem:[#allocation2] sm:$0xff]
        %v508 = vadd.f32 %v506, %v507
        %v509 = vld [vmem:[%s5] sm:$0x1]
        %v511 = vperm.slane %v509, 0
        %v513 = vadd.f32 %v508, %v511
        %514 = vst.msk [vmem:[%s405] sm:$0xff] %vm500, %v513
      $region52: #{gpt_forward.8} parent=43 // pred_fallthru
        _
      %p515 = scmp.lt.s32.totalorder %s22, 1
      %s516 = scalar_select %p515, %s22, 1
      %p517 = scmp.lt.s32.totalorder %s23, 0
      %s518 = scalar_select %p517, %s23, 0
      %s519 = sadd.s32 %s518, %s516
      %s520 = smul.addr %s519, 8
      %s521 = scalar_lea.vmem %s6, %s520
      // Predicated region
      $region53: #{gpt_forward.8} parent=43 // pred_check
        %p522 = pneg %p217
      $region54: #{gpt_forward.8} parent=43 // pred_check_branch
        %524 = sbr.rel (%p522) target = $region56
      $region55: #{gpt_forward.8} parent=43 // pred_region
        _
      $region56: #{gpt_forward.8} parent=43 // pred_fallthru
        _
    $region44: #{gpt_forward.8} parent=5 // pred_fallthru
      _
    %p525 = scmp.le.s32.totalorder 2, %s12
    // Predicated region
    $region57: #{gpt_forward.8} parent=5 // pred_check
      %p526 = pneg %p525
    $region58: #{gpt_forward.8} parent=5 // pred_check_branch
      %528 = sbr.rel (%p526) target = $region60
    $region59: #{gpt_forward.8} parent=5 // pred_region
      %s529 = ssub.s32 %s12, 2
      // Predicated region
      $region61: #{gpt_forward.8} parent=59 // pred_check
        %p530 = pneg %p223
      $region62: #{gpt_forward.8} parent=59 // pred_check_branch
        %532 = sbr.rel (%p530) target = $region64
      $region63: #{gpt_forward.8} parent=59 // pred_region
        %p533 = scmp.lt.s32.totalorder %s25, 1
        %s534 = scalar_select %p533, %s25, 1
        %p535 = scmp.lt.s32.totalorder %s26, 0
        %s536 = scalar_select %p535, %s26, 0
        %s537 = sadd.s32 %s536, %s534
        %s538 = smul.addr %s537, 8
        %s539 = scalar_lea.vmem %s6, %s538
      $region64: #{gpt_forward.8} parent=59 // pred_fallthru
        _
    $region60: #{gpt_forward.8} parent=5 // pred_fallthru
      _
  $region6: #{gpt_forward.8} parent=0 // loop_footer
    %s16 = sadd.s32 1, %s12
  $region7: #{gpt_forward.8} parent=0 // loop_footer_branch
    %11 = sbr.rel target = $region3
  $region8: #{gpt_forward.8} parent=0 // loop_exit
    _

// kernel: gpt_forward.9
$region0: #{gpt_forward.9}
  #allocation0 [shape = 'u32[]', space=smem, size = 0x4, offset = 0x4, fixed_abs, tag = 'smem constant byte address 0x4 - core index']
  #allocation1 [shape = 'u32[72,128]{1,0:T(1,128)}', space=vmem, size = 0x9000, scoped, tag = 'internal scratch']
  #allocation2 [shape = 'bf16[8,32]{1,0:T(8,128)(2,1)}', space=vmem, size = 0x800, scoped, tag = 'scratch operand']
  #allocation3 [shape = 'f32[8,32]{1,0:T(8,128)}', space=vmem, size = 0x1000, scoped, tag = 'scratch operand']
  %s0 = inlined_call_operand.vmem [shape: f32[2,8,32], index: 0, kind: input, shape index: {}]
  %s1 = inlined_call_operand.vmem [shape: f32[1,32], index: 1, kind: input, shape index: {}]
  %s2 = inlined_call_operand.vmem [shape: f32[1,32], index: 2, kind: input, shape index: {}]
  %s3 = inlined_call_operand.vmem [shape: bf16[32,128], index: 3, kind: input, shape index: {}]
  %s4 = inlined_call_operand.vmem [shape: f32[1,128], index: 4, kind: input, shape index: {}]
  %s5 = inlined_call_operand.vmem [shape: bf16[128,32], index: 5, kind: input, shape index: {}]
  %s6 = inlined_call_operand.vmem [shape: f32[1,32], index: 6, kind: input, shape index: {}]
  %s7 = inlined_call_operand.vmem [shape: f32[2,8,32], index: 7, kind: output, shape index: {}]
  %s8 = sld [smem:[#allocation0]]
  $region69: #{gpt_forward.9} parent=0
    _
  %s10 = ssub.s32 1, %s8
  %s11 = scalar_select 0, %s10, %s8
  loop: start=0, step=1, limit=4
  $region2: #{gpt_forward.9} parent=0 // loop_pre_header
    _
  $region3: #{gpt_forward.9} parent=0 // loop_header
    %s13 = sphi 0, %s17
    %p14 = scmp.ge.s32.totalorder %s13, 4
    %s20 = sphi 0, %s32
    %s21 = sphi 0, %s28
    %s22 = sphi 0, %s20
    %s23 = sphi 0, %s21
    %s24 = sphi 0, %s22
    %s25 = sphi 0, %s23
    %s35 = sphi 0, %s37
    %s38 = sphi 0, %s35
    %s39 = sphi 0, %s38
    %s55 = sphi 0, %s39
    %s59 = sphi 0, %s59
    %s61 = sphi 0, %s59
    %s62 = sphi 0, %s61
    %s76 = sphi 0, %s62
    %s80 = sphi 0, %s80
    %s82 = sphi 0, %s80
    %s83 = sphi 0, %s82
    %s97 = sphi 0, %s83
    %s103 = sphi 0, %s105
    %s106 = sphi 0, %s103
    %s107 = sphi 0, %s106
    %s123 = sphi 0, %s107
    %s129 = sphi 0, %s131
    %s132 = sphi 0, %s129
    %s133 = sphi 0, %s132
    %s149 = sphi 0, %s133
    %s155 = sphi 0, %s157
    %s158 = sphi 0, %s155
    %s159 = sphi 0, %s158
    %s175 = sphi 0, %s159
    %s179 = sphi 0, %s179
    %s181 = sphi 0, %s179
    %s182 = sphi 0, %s181
    %s196 = sphi 0, %s182
    %s202 = sphi 0, %s204
    %s205 = sphi 0, %s202
    %s206 = sphi 0, %s205
    %s222 = sphi 0, %s206
  $region4: #{gpt_forward.9} parent=0 // loop_header_branch
    %16 = sbr.rel (%p14) target = $region8
  $region5: #{gpt_forward.9} parent=0 // loop_body
    %s18 = ssub.s32 %s13, 1
    %s19 = ssub.s32 %s13, 2
    %s26 = sadd.s32 1, %s21
    %p27 = scmp.ge.s32.totalorder %s26, 1
    %s28 = scalar_select %p27, 0, %s26
    %s29 = sadd.s32 1, %s20
    %s30 = scalar_select %p27, %s29, %s20
    %p31 = scmp.ge.s32.totalorder %s30, 2
    %s32 = scalar_select %p31, 0, %s30
    %s33 = ssub.s32 %s20, %s32
    %p34 = scmp.eq.s32.totalorder %s33, 0
    %s36 = sadd.s32 %s35, 1
    %s37 = scalar_select %p34, %s35, %s36
    %p40 = pneg %p34
    %p41 = scmp.eq.s32.totalorder %s13, 1
    %p42 = por %p40, %p41
    %p43 = scmp.ne.s32.totalorder %s35, %s38
    %p44 = scmp.eq.s32.totalorder %s13, 0
    %p45 = por %p43, %p44
    %p46 = scmp.ne.s32.totalorder %s35, %s38
    %p47 = scmp.eq.s32.totalorder %s18, 1
    %p48 = por %p46, %p47
    %p49 = scmp.ne.s32.totalorder %s38, %s39
    %p50 = scmp.eq.s32.totalorder %s18, 0
    %p51 = por %p49, %p50
    %p52 = scmp.ne.s32.totalorder %s38, %s39
    %p53 = scmp.eq.s32.totalorder %s19, 1
    %p54 = por %p52, %p53
    %p56 = scmp.ne.s32.totalorder %s39, %s55
    %p57 = scmp.eq.s32.totalorder %s19, 0
    %p58 = por %p56, %p57
    %s60 = sadd.s32 %s59, 1
    %p63 = scmp.eq.s32.totalorder %s13, 1
    %p64 = scmp.ne.s32.totalorder %s59, %s61
    %p65 = scmp.eq.s32.totalorder %s13, 0
    %p66 = por %p64, %p65
    %p67 = scmp.ne.s32.totalorder %s59, %s61
    %p68 = scmp.eq.s32.totalorder %s18, 1
    %p69 = por %p67, %p68
    %p70 = scmp.ne.s32.totalorder %s61, %s62
    %p71 = scmp.eq.s32.totalorder %s18, 0
    %p72 = por %p70, %p71
    %p73 = scmp.ne.s32.totalorder %s61, %s62
    %p74 = scmp.eq.s32.totalorder %s19, 1
    %p75 = por %p73, %p74
    %p77 = scmp.ne.s32.totalorder %s62, %s76
    %p78 = scmp.eq.s32.totalorder %s19, 0
    %p79 = por %p77, %p78
    %s81 = sadd.s32 %s80, 1
    %p84 = scmp.eq.s32.totalorder %s13, 1
    %p85 = scmp.ne.s32.totalorder %s80, %s82
    %p86 = scmp.eq.s32.totalorder %s13, 0
    %p87 = por %p85, %p86
    %p88 = scmp.ne.s32.totalorder %s80, %s82
    %p89 = scmp.eq.s32.totalorder %s18, 1
    %p90 = por %p88, %p89
    %p91 = scmp.ne.s32.totalorder %s82, %s83
    %p92 = scmp.eq.s32.totalorder %s18, 0
    %p93 = por %p91, %p92
    %p94 = scmp.ne.s32.totalorder %s82, %s83
    %p95 = scmp.eq.s32.totalorder %s19, 1
    %p96 = por %p94, %p95
    %p98 = scmp.ne.s32.totalorder %s83, %s97
    %p99 = scmp.eq.s32.totalorder %s19, 0
    %p100 = por %p98, %p99
    %s101 = ssub.s32 %s21, %s28
    %p102 = scmp.eq.s32.totalorder %s101, 0
    %s104 = sadd.s32 %s103, 1
    %s105 = scalar_select %p102, %s103, %s104
    %p108 = pneg %p102
    %p109 = scmp.eq.s32.totalorder %s13, 1
    %p110 = por %p108, %p109
    %p111 = scmp.ne.s32.totalorder %s103, %s106
    %p112 = scmp.eq.s32.totalorder %s13, 0
    %p113 = por %p111, %p112
    %p114 = scmp.ne.s32.totalorder %s103, %s106
    %p115 = scmp.eq.s32.totalorder %s18, 1
    %p116 = por %p114, %p115
    %p117 = scmp.ne.s32.totalorder %s106, %s107
    %p118 = scmp.eq.s32.totalorder %s18, 0
    %p119 = por %p117, %p118
    %p120 = scmp.ne.s32.totalorder %s106, %s107
    %p121 = scmp.eq.s32.totalorder %s19, 1
    %p122 = por %p120, %p121
    %p124 = scmp.ne.s32.totalorder %s107, %s123
    %p125 = scmp.eq.s32.totalorder %s19, 0
    %p126 = por %p124, %p125
    %s127 = ssub.s32 %s21, %s28
    %p128 = scmp.eq.s32.totalorder %s127, 0
    %s130 = sadd.s32 %s129, 1
    %s131 = scalar_select %p128, %s129, %s130
    %p134 = pneg %p128
    %p135 = scmp.eq.s32.totalorder %s13, 1
    %p136 = por %p134, %p135
    %p137 = scmp.ne.s32.totalorder %s129, %s132
    %p138 = scmp.eq.s32.totalorder %s13, 0
    %p139 = por %p137, %p138
    %p140 = scmp.ne.s32.totalorder %s129, %s132
    %p141 = scmp.eq.s32.totalorder %s18, 1
    %p142 = por %p140, %p141
    %p143 = scmp.ne.s32.totalorder %s132, %s133
    %p144 = scmp.eq.s32.totalorder %s18, 0
    %p145 = por %p143, %p144
    %p146 = scmp.ne.s32.totalorder %s132, %s133
    %p147 = scmp.eq.s32.totalorder %s19, 1
    %p148 = por %p146, %p147
    %p150 = scmp.ne.s32.totalorder %s133, %s149
    %p151 = scmp.eq.s32.totalorder %s19, 0
    %p152 = por %p150, %p151
    %s153 = ssub.s32 %s21, %s28
    %p154 = scmp.eq.s32.totalorder %s153, 0
    %s156 = sadd.s32 %s155, 1
    %s157 = scalar_select %p154, %s155, %s156
    %p160 = pneg %p154
    %p161 = scmp.eq.s32.totalorder %s13, 1
    %p162 = por %p160, %p161
    %p163 = scmp.ne.s32.totalorder %s155, %s158
    %p164 = scmp.eq.s32.totalorder %s13, 0
    %p165 = por %p163, %p164
    %p166 = scmp.ne.s32.totalorder %s155, %s158
    %p167 = scmp.eq.s32.totalorder %s18, 1
    %p168 = por %p166, %p167
    %p169 = scmp.ne.s32.totalorder %s158, %s159
    %p170 = scmp.eq.s32.totalorder %s18, 0
    %p171 = por %p169, %p170
    %p172 = scmp.ne.s32.totalorder %s158, %s159
    %p173 = scmp.eq.s32.totalorder %s19, 1
    %p174 = por %p172, %p173
    %p176 = scmp.ne.s32.totalorder %s159, %s175
    %p177 = scmp.eq.s32.totalorder %s19, 0
    %p178 = por %p176, %p177
    %s180 = sadd.s32 %s179, 1
    %p183 = scmp.eq.s32.totalorder %s13, 1
    %p184 = scmp.ne.s32.totalorder %s179, %s181
    %p185 = scmp.eq.s32.totalorder %s13, 0
    %p186 = por %p184, %p185
    %p187 = scmp.ne.s32.totalorder %s179, %s181
    %p188 = scmp.eq.s32.totalorder %s18, 1
    %p189 = por %p187, %p188
    %p190 = scmp.ne.s32.totalorder %s181, %s182
    %p191 = scmp.eq.s32.totalorder %s18, 0
    %p192 = por %p190, %p191
    %p193 = scmp.ne.s32.totalorder %s181, %s182
    %p194 = scmp.eq.s32.totalorder %s19, 1
    %p195 = por %p193, %p194
    %p197 = scmp.ne.s32.totalorder %s182, %s196
    %p198 = scmp.eq.s32.totalorder %s19, 0
    %p199 = por %p197, %p198
    %s200 = ssub.s32 %s20, %s32
    %p201 = scmp.eq.s32.totalorder %s200, 0
    %s203 = sadd.s32 %s202, 1
    %s204 = scalar_select %p201, %s202, %s203
    %p207 = pneg %p201
    %p208 = scmp.eq.s32.totalorder %s13, 1
    %p209 = por %p207, %p208
    %p210 = scmp.ne.s32.totalorder %s202, %s205
    %p211 = scmp.eq.s32.totalorder %s13, 0
    %p212 = por %p210, %p211
    %p213 = scmp.ne.s32.totalorder %s202, %s205
    %p214 = scmp.eq.s32.totalorder %s18, 1
    %p215 = por %p213, %p214
    %p216 = scmp.ne.s32.totalorder %s205, %s206
    %p217 = scmp.eq.s32.totalorder %s18, 0
    %p218 = por %p216, %p217
    %p219 = scmp.ne.s32.totalorder %s205, %s206
    %p220 = scmp.eq.s32.totalorder %s19, 1
    %p221 = por %p219, %p220
    %p223 = scmp.ne.s32.totalorder %s206, %s222
    %p224 = scmp.eq.s32.totalorder %s19, 0
    %p225 = por %p223, %p224
    %p226 = scmp.le.s32.totalorder 1, %s13
    %p227 = scmp.lt.s32.totalorder %s13, 3
    %p228 = pnand %p226, %p227
    %p229 = pneg %p228
    // Predicated region
    $region9: #{gpt_forward.9} parent=5 // pred_check
      _
    $region10: #{gpt_forward.9} parent=5 // pred_check_branch
      %231 = sbr.rel (%p228) target = $region12
    $region11: #{gpt_forward.9} parent=5 // pred_region
      %s232 = ssub.s32 %s13, 1
      // Predicated region
      $region13: #{gpt_forward.9} parent=11 // pred_check
        %p233 = pneg %p72
      $region14: #{gpt_forward.9} parent=11 // pred_check_branch
        %235 = sbr.rel (%p233) target = $region16
      $region15: #{gpt_forward.9} parent=11 // pred_region
        _
      $region16: #{gpt_forward.9} parent=11 // pred_fallthru
        _
      // Predicated region
      $region17: #{gpt_forward.9} parent=11 // pred_check
        %p236 = pneg %p93
      $region18: #{gpt_forward.9} parent=11 // pred_check_branch
        %238 = sbr.rel (%p236) target = $region20
      $region19: #{gpt_forward.9} parent=11 // pred_region
        _
      $region20: #{gpt_forward.9} parent=11 // pred_fallthru
        _
      // Predicated region
      $region21: #{gpt_forward.9} parent=11 // pred_check
        %p239 = pneg %p119
      $region22: #{gpt_forward.9} parent=11 // pred_check_branch
        %241 = sbr.rel (%p239) target = $region24
      $region23: #{gpt_forward.9} parent=11 // pred_region
        %p242 = scmp.lt.s32.totalorder %s23, 0
        %s243 = scalar_select %p242, %s23, 0
        %s244 = smul.addr %s243, 4
        %s245 = scalar_lea.vmem %s3, %s244
      $region24: #{gpt_forward.9} parent=11 // pred_fallthru
        _
      // Predicated region
      $region25: #{gpt_forward.9} parent=11 // pred_check
        %p246 = pneg %p145
      $region26: #{gpt_forward.9} parent=11 // pred_check_branch
        %248 = sbr.rel (%p246) target = $region28
      $region27: #{gpt_forward.9} parent=11 // pred_region
        %p249 = scmp.lt.s32.totalorder %s23, 0
        %s250 = scalar_select %p249, %s23, 0
        %s251 = scalar_lea.vmem %s4, %s250
      $region28: #{gpt_forward.9} parent=11 // pred_fallthru
        _
      // Predicated region
      $region29: #{gpt_forward.9} parent=11 // pred_check
        %p252 = pneg %p171
      $region30: #{gpt_forward.9} parent=11 // pred_check_branch
        %254 = sbr.rel (%p252) target = $region32
      $region31: #{gpt_forward.9} parent=11 // pred_region
        %s255 = smul.u32 16, %s23
        %p256 = scmp.lt.s32.totalorder %s255, 15
        %s257 = scalar_select %p256, %s255, 15
        %s258 = smul.addr %s257, 4
        %s259 = scalar_lea.vmem %s5, %s258
        %s260 = smul.u32 16, %s23
      $region32: #{gpt_forward.9} parent=11 // pred_fallthru
        _
      // Predicated region
      $region33: #{gpt_forward.9} parent=11 // pred_check
        %p261 = pneg %p192
      $region34: #{gpt_forward.9} parent=11 // pred_check_branch
        %263 = sbr.rel (%p261) target = $region36
      $region35: #{gpt_forward.9} parent=11 // pred_region
        _
      $region36: #{gpt_forward.9} parent=11 // pred_fallthru
        _
    $region12: #{gpt_forward.9} parent=5 // pred_fallthru
      _
    %p264 = scmp.lt.s32.totalorder %s13, 2
    // Predicated region
    $region37: #{gpt_forward.9} parent=5 // pred_check
      %p265 = pneg %p264
    $region38: #{gpt_forward.9} parent=5 // pred_check_branch
      %267 = sbr.rel (%p265) target = $region40
    $region39: #{gpt_forward.9} parent=5 // pred_region
      // Predicated region
      $region41: #{gpt_forward.9} parent=39 // pred_check
        %p268 = pneg %p45
      $region42: #{gpt_forward.9} parent=39 // pred_check_branch
        %270 = sbr.rel (%p268) target = $region44
      $region43: #{gpt_forward.9} parent=39 // pred_region
        %p271 = scmp.lt.s32.totalorder %s20, 1
        %s272 = scalar_select %p271, %s20, 1
        %s273 = smul.addr %s272, 8
        %s274 = scalar_lea.vmem %s0, %s273
      $region44: #{gpt_forward.9} parent=39 // pred_fallthru
        _
    $region40: #{gpt_forward.9} parent=5 // pred_fallthru
      _
    %p275 = scmp.le.s32.totalorder 1, %s13
    %p276 = scmp.lt.s32.totalorder %s13, 3
    %p277 = pnand %p275, %p276
    %p278 = pneg %p277
    // Predicated region
    $region45: #{gpt_forward.9} parent=5 // pred_check
      _
    $region46: #{gpt_forward.9} parent=5 // pred_check_branch
      %280 = sbr.rel (%p277) target = $region48
    $region47: #{gpt_forward.9} parent=5 // pred_region
      %s281 = ssub.s32 %s13, 1
      %p282 = scmp.lt.s32.totalorder %s22, 1
      %s283 = scalar_select %p282, %s22, 1
      %s284 = smul.addr %s283, 8
      %s285 = scalar_lea.vmem %s0, %s284
      %p286 = pneg %p51
      %p287 = pneg %p48
      %p288 = pneg %p72
      %p289 = pneg %p69
      %p290 = pneg %p93
      %p291 = pneg %p90
      %p292 = scmp.lt.s32.totalorder %s23, 0
      %s293 = scalar_select %p292, %s23, 0
      %s294 = smul.addr %s293, 4
      %s295 = scalar_lea.vmem %s3, %s294
      %p296 = pneg %p119
      %p297 = pneg %p116
      %p298 = scmp.lt.s32.totalorder %s23, 0
      %s299 = scalar_select %p298, %s23, 0
      %s300 = scalar_lea.vmem %s4, %s299
      %p301 = pneg %p145
      %p302 = pneg %p142
      %s303 = smul.u32 16, %s23
      %p304 = scmp.lt.s32.totalorder %s303, 15
      %s305 = scalar_select %p304, %s303, 15
      %s306 = smul.addr %s305, 4
      %s307 = scalar_lea.vmem %s5, %s306
      %p308 = pneg %p171
      %p309 = pneg %p168
      %p310 = pneg %p192
      %p311 = pneg %p189
      %p312 = pneg %p218
      %p313 = pneg %p215
      %p314 = scmp.lt.s32.totalorder %s22, 1
      %s315 = scalar_select %p314, %s22, 1
      %s316 = smul.addr %s315, 8
      %s317 = scalar_lea.vmem %s7, %s316
      %p318 = scmp.lt.s32.totalorder %s22, 1
      %s319 = scalar_select %p318, %s22, 1
      %s320 = smul.addr %s319, 8
      %s321 = scalar_lea.vmem %s0, %s320
      %p322 = scmp.lt.s32.totalorder %s23, 0
      %s323 = scalar_select %p322, %s23, 0
      %s324 = smul.addr %s323, 4
      %s325 = scalar_lea.vmem %s3, %s324
      %p326 = scmp.lt.s32.totalorder %s23, 0
      %s327 = scalar_select %p326, %s23, 0
      %s328 = scalar_lea.vmem %s4, %s327
      %s329 = smul.u32 16, %s23
      %p330 = scmp.lt.s32.totalorder %s329, 15
      %s331 = scalar_select %p330, %s329, 15
      %s332 = smul.addr %s331, 4
      %s333 = scalar_lea.vmem %s5, %s332
      %s334 = smul.u32 16, %s23
      %p335 = scmp.lt.s32.totalorder %s22, 1
      %s336 = scalar_select %p335, %s22, 1
      %s337 = smul.addr %s336, 8
      %s338 = scalar_lea.vmem %s7, %s337
      %p340 = scmp.eq.s32.totalorder %s23, 0
      // Predicated region
      $region49: #{gpt_forward.9} parent=47 // pred_check
        %p341 = pneg %p340
      $region50: #{gpt_forward.9} parent=47 // pred_check_branch
        %343 = sbr.rel (%p341) target = $region52
      $region51: #{gpt_forward.9} parent=47 // pred_region
        %v344 = vld [vmem:[%s321] sm:$0xff]
        %v345 = vld [vmem:[%s1] sm:$0x1]
        %v346 = vld [vmem:[%s2] sm:$0x1]
        %vm347 = vcmask 261120
        %v348 = vsel %vm347, %v344, 0.0
        %349 = vadd.xlane.f32.xlu0 %v348
        %v350 = vpop.xlane.xlu0 %349
        %v351 = vrcp.pop 32.0
        %v352 = vmul.f32 32.0, %v351
        %v353 = vsub.f32 1.0, %v352
        %v354 = vmul.f32 %v351, %v353
        %v355 = vadd.f32 %v351, %v354
        %vm356 = vweird.f32 %v351
        %v357 = vsel %vm356, %v351, %v355
        %v358 = vmul.f32 %v350, %v357
        %v359 = vsub.f32 %v344, %v358
        %v360 = vmul.f32 %v359, %v359
        %v361 = vsel %vm347, %v360, 0.0
        %362 = vadd.xlane.f32.xlu0 %v361
        %v363 = vpop.xlane.xlu0 %362
        %v364 = vmul.f32 %v363, %v357
        %v365 = vadd.f32 %v364, 1e-05
        %v366 = vrsqrt.pop %v365
        %v367 = vmul.f32 %v366, %v365
        %v368 = vmul.f32 %v367, %v366
        %v369 = vmul.f32 0.5, %v368
        %v370 = vsub.f32 1.5, %v369
        %v371 = vmul.f32 %v366, %v370
        %vm372 = vweird.f32 %v365
        %vm373 = vweird.f32 %v366
        %vm374 = vmor %vm372, %vm373
        %v375 = vsel %vm374, %v366, %v371
        %v376 = vmul.f32 %v359, %v375
        %v378 = vperm.slane %v345, 0
        %v380 = vmul.f32 %v376, %v378
        %v382 = vperm.slane %v346, 0
        %v384 = vadd.f32 %v380, %v382
        %v385 = vpack.c.bf16 %v384, %v384
        %vm386 = vcmask 257024
        %387 = vst.msk [vmem:[#allocation2] sm:$0xf] %vm386, %v385
        %388 = vst.msk [vmem:[#allocation3] sm:$0xff] %vm347, 0.0
      $region52: #{gpt_forward.9} parent=47 // pred_fallthru
        _
      %v389 = vld [vmem:[#allocation2] sm:$0xf]
      %v390 = vld [vmem:[%s325] sm:$0xf]
      %v391 = vld [vmem:[%s325 + $0x4] sm:$0xf]
      %v392 = vld [vmem:[%s325 + $0x8] sm:$0xf]
      %v393 = vld [vmem:[%s325 + $0xc] sm:$0xf]
      %v394 = vld [vmem:[%s328] sm:$0x1]
      %v396 = vperm.slane %v394, 0
      %v402 = vunpack.c.l.b16 %v390
      %v403 = vunpack.c.l.b16 %v391
      %v404 = vunpack.c.l.b16 %v392
      %v405 = vunpack.c.l.b16 %v393
      %v406 = vpack.c.b16 %v403, %v402
      %v407 = vpack.c.b16 %v405, %v404
      %vm410 = vcmask 261120
      %v412 = vsel %vm410, %v389, 0
      %414 = vmatpush.bf16.msra.mxu0 0
      %415 = vmatpush.bf16.msra.mxu0 0
      %416 = vmatpush.bf16.msra.mxu0 0
      %417 = vmatpush.bf16.msra.mxu0 0
      %418 = vmatpush.bf16.msra.mxu0 0
      %419 = vmatpush.bf16.msra.mxu0 0
      %420 = vmatpush.bf16.msra.mxu0 %v407
      %421 = vmatpush.bf16.msra.mxu0 %v406
      %422 = vmatmul.bf16.gmra.mxu0 %v412
      %v423 = vpop.f32.mrf.mxu0
      %v424 = vadd.f32 %v396, %v423
      %v425 = vpop.f32.mrf.mxu0
      %426 = vdwg.mxu0
      %v427 = vmul.f32 %v424, %v424
      %v428 = vmul.f32 %v424, %v427
      %v429 = vmul.f32 %v428, 0.044715
      %v430 = vadd.f32 %v424, %v429
      %v431 = vmul.f32 %v430, 0.7978846
      %v432 = vtanh.pop %v431
      %v433 = vadd.f32 %v432, 1.0
      %v434 = vmul.f32 %v433, 0.5
      %v435 = vmul.f32 %v424, %v434
      %v436 = vld [vmem:[#allocation3] sm:$0xff]
      %v437 = vpack.c.bf16 %v435, %v435
      %v438 = vld [vmem:[%s333] sm:$0xf]
      %v439 = vld [vmem:[%s333 + $0x4] sm:$0xf]
      %v440 = vld [vmem:[%s333 + $0x8] sm:$0xf]
      %v441 = vld [vmem:[%s333 + $0xc] sm:$0xf]
      %v442 = vld [vmem:[%s333 + $0x10] sm:$0xf]
      %v443 = vld [vmem:[%s333 + $0x14] sm:$0xf]
      %v444 = vld [vmem:[%s333 + $0x18] sm:$0xf]
      %v445 = vld [vmem:[%s333 + $0x1c] sm:$0xf]
      %v446 = vld [vmem:[%s333 + $0x20] sm:$0xf]
      %v447 = vld [vmem:[%s333 + $0x24] sm:$0xf]
      %v448 = vld [vmem:[%s333 + $0x28] sm:$0xf]
      %v449 = vld [vmem:[%s333 + $0x2c] sm:$0xf]
      %v450 = vld [vmem:[%s333 + $0x30] sm:$0xf]
      %v451 = vld [vmem:[%s333 + $0x34] sm:$0xf]
      %v452 = vld [vmem:[%s333 + $0x38] sm:$0xf]
      %v453 = vld [vmem:[%s333 + $0x3c] sm:$0xf]
      %v470 = vunpack.c.l.b16 %v438
      %v471 = vunpack.c.l.b16 %v439
      %v472 = vunpack.c.l.b16 %v440
      %v473 = vunpack.c.l.b16 %v441
      %v474 = vunpack.c.l.b16 %v442
      %v475 = vunpack.c.l.b16 %v443
      %v476 = vunpack.c.l.b16 %v444
      %v477 = vunpack.c.l.b16 %v445
      %v478 = vunpack.c.l.b16 %v446
      %v479 = vunpack.c.l.b16 %v447
      %v480 = vunpack.c.l.b16 %v448
      %v481 = vunpack.c.l.b16 %v449
      %v482 = vunpack.c.l.b16 %v450
      %v483 = vunpack.c.l.b16 %v451
      %v484 = vunpack.c.l.b16 %v452
      %v485 = vunpack.c.l.b16 %v453
      %v486 = vpack.c.b16 %v471, %v470
      %v487 = vpack.c.b16 %v473, %v472
      %v488 = vpack.c.b16 %v475, %v474
      %v489 = vpack.c.b16 %v477, %v476
      %v490 = vpack.c.b16 %v479, %v478
      %v491 = vpack.c.b16 %v481, %v480
      %v492 = vpack.c.b16 %v483, %v482
      %v493 = vpack.c.b16 %v485, %v484
      %502 = vmatpush.bf16.msra.mxu0 %v493
      %503 = vmatpush.bf16.msra.mxu0 %v492
      %504 = vmatpush.bf16.msra.mxu0 %v491
      %505 = vmatpush.bf16.msra.mxu0 %v490
      %506 = vmatpush.bf16.msra.mxu0 %v489
      %507 = vmatpush.bf16.msra.mxu0 %v488
      %508 = vmatpush.bf16.msra.mxu0 %v487
      %509 = vmatpush.bf16.msra.mxu0 %v486
      %510 = vmatmul.bf16.gmra.mxu0 %v437
      %v511 = vpop.f32.mrf.mxu0
      %v512 = vadd.f32 0.0, %v511
      %v513 = vpop.f32.mrf.mxu0
      %514 = vdwg.mxu0
      %v515 = vadd.f32 %v436, %v512
      %516 = vst.msk [vmem:[#allocation3] sm:$0xff] %vm410, %v515
      // Predicated region
      $region53: #{gpt_forward.9} parent=47 // pred_check
        %p517 = pneg %p340
      $region54: #{gpt_forward.9} parent=47 // pred_check_branch
        %519 = sbr.rel (%p517) target = $region56
      $region55: #{gpt_forward.9} parent=47 // pred_region
        %v520 = vld [vmem:[%s321] sm:$0xff]
        %v521 = vld [vmem:[#allocation3] sm:$0xff]
        %v522 = vadd.f32 %v520, %v521
        %v523 = vld [vmem:[%s6] sm:$0x1]
        %v525 = vperm.slane %v523, 0
        %v527 = vadd.f32 %v522, %v525
        %528 = vst.msk [vmem:[%s338] sm:$0xff] %vm410, %v527
      $region56: #{gpt_forward.9} parent=47 // pred_fallthru
        _
      %p529 = scmp.lt.s32.totalorder %s22, 1
      %s530 = scalar_select %p529, %s22, 1
      %s531 = smul.addr %s530, 8
      %s532 = scalar_lea.vmem %s7, %s531
      // Predicated region
      $region57: #{gpt_forward.9} parent=47 // pred_check
        %p533 = pneg %p215
      $region58: #{gpt_forward.9} parent=47 // pred_check_branch
        %535 = sbr.rel (%p533) target = $region60
      $region59: #{gpt_forward.9} parent=47 // pred_region
        _
      $region60: #{gpt_forward.9} parent=47 // pred_fallthru
        _
    $region48: #{gpt_forward.9} parent=5 // pred_fallthru
      _
    %p536 = scmp.le.s32.totalorder 2, %s13
    // Predicated region
    $region61: #{gpt_forward.9} parent=5 // pred_check
      %p537 = pneg %p536
    $region62: #{gpt_forward.9} parent=5 // pred_check_branch
      %539 = sbr.rel (%p537) target = $region64
    $region63: #{gpt_forward.9} parent=5 // pred_region
      %s540 = ssub.s32 %s13, 2
      // Predicated region
      $region65: #{gpt_forward.9} parent=63 // pred_check
        %p541 = pneg %p221
      $region66: #{gpt_forward.9} parent=63 // pred_check_branch
        %543 = sbr.rel (%p541) target = $region68
      $region67: #{gpt_forward.9} parent=63 // pred_region
        %p544 = scmp.lt.s32.totalorder %s24, 1
        %s545 = scalar_select %p544, %s24, 1
        %s546 = smul.addr %s545, 8
        %s547 = scalar_lea.vmem %s7, %s546
      $region68: #{gpt_forward.9} parent=63 // pred_fallthru
        _
    $region64: #{gpt_forward.9} parent=5 // pred_fallthru
      _
  $region6: #{gpt_forward.9} parent=0 // loop_footer
    %s17 = sadd.s32 1, %s13
  $region7: #{gpt_forward.9} parent=0 // loop_footer_branch
    %12 = sbr.rel target = $region3
  $region8: #{gpt_forward.9} parent=0 // loop_exit
    _

</llo_original>
